<compile_context>
chip_gen: v5e
topology: v5e:2x2
jax: 0.10.0
libtpu: 0.0.40
codegen_flags: <defaults>
</compile_context>

<pallas_src>
import functools

import jax
import jax.numpy as jnp
from jax.experimental import pallas as pl
from jax.experimental.pallas import tpu as pltpu

LN_EPS = 1e-5  # PyTorch nn.LayerNorm default


def _round_up(n: int, m: int) -> int:
    return pl.cdiv(n, m) * m


def _layer_norm_f32(h, gamma, beta, n_real: int):
    """LayerNorm over the last dim using the real (unpadded) feature count.

    Padded columns of `h` are exactly 0 (zero-padded weights/bias + ReLU) so they
    contribute nothing to sum(h) / sum(h*h); padded gamma/beta are 0 so padded
    output lanes stay exactly 0.  One-pass variance: var = E[h^2] - mean^2.
    """
    inv_n = 1.0 / float(n_real)
    mean = jnp.sum(h, axis=-1, keepdims=True) * inv_n
    meansq = jnp.sum(h * h, axis=-1, keepdims=True) * inv_n
    var = meansq - mean * mean
    inv_std = jax.lax.rsqrt(var + LN_EPS)
    return (h - mean) * inv_std * gamma + beta


def softq_kernel(h0_real, h1_real,
                 x_ref,
                 w1_ref, b1_ref, g1_ref, be1_ref,
                 w2_ref, b2_ref, g2_ref, be2_ref,
                 w3_ref, b3_ref, g3_ref, be3_ref,
                 w4_ref, b4_ref,
                 q_ref):
    bf16, f32 = jnp.bfloat16, jnp.float32

    x = x_ref[...].astype(bf16)                                           # (TB, din)

    # linear1 + ReLU + ln1  (over hidden_size[0])
    h = jnp.dot(x, w1_ref[...], preferred_element_type=f32) + b1_ref[...]
    h = jnp.maximum(h, 0.0)
    h = _layer_norm_f32(h, g1_ref[...], be1_ref[...], h0_real)            # (TB, H0_p)

    # linear2 + ReLU + ln2  (normalized over linear2's actual output width)
    h = jnp.dot(h.astype(bf16), w2_ref[...], preferred_element_type=f32) + b2_ref[...]
    h = jnp.maximum(h, 0.0)
    h = _layer_norm_f32(h, g2_ref[...], be2_ref[...], h0_real)            # (TB, H0_p)

    # linear3 + ReLU + ln3  (over hidden_size[1])
    h = jnp.dot(h.astype(bf16), w3_ref[...], preferred_element_type=f32) + b3_ref[...]
    h = jnp.maximum(h, 0.0)
    h = _layer_norm_f32(h, g3_ref[...], be3_ref[...], h1_real)            # (TB, H1_p)

    # Q head: (1, H1_p) contracted against (TB, H1_p) on the feature dim (NT dot)
    # -> lane-dense (1, TB) row, stored unmasked.
    q_row = jax.lax.dot_general(
        w4_ref[...], h.astype(bf16),
        dimension_numbers=(((1,), (1,)), ((), ())),
        preferred_element_type=f32)                                       # (1, TB)
    q_ref[...] = (q_row + b4_ref[...]).astype(q_ref.dtype)


def softq_forward(x, params):
    """SoftQNetwork.forward: x is (B, num_inputs + num_actions) f32 -> (B, 1) f32."""
    dims = params["dims"]
    h0_p, h1_p = dims["h0_p"], dims["h1_p"]

    B, din = x.shape
    assert din == dims["din"], (din, dims["din"])

    # Batch tiling: big tiles amortize the ~0.35us/grid-step overhead; cap at 256
    # rows (safe for v5e spill / vst pressure, good for v6e/v7x), and keep >=2 grid
    # steps when the batch allows so v7x can shard the parallel axis over both TCs.
    b8 = _round_up(B, 8)
    if b8 <= 128:
        tb = b8                                    # tiny batch: one small tile
    else:
        tb = 256 if _round_up(B, 128) >= 512 else 128
    bp = _round_up(B, tb)
    if bp > B:
        x = jnp.pad(x, ((0, bp - B), (0, 0)))
    grid = (bp // tb,)

    weight_args = (
        params["w1"], params["b1"], params["g1"], params["be1"],
        params["w2"], params["b2"], params["g2"], params["be2"],
        params["w3"], params["b3"], params["g3"], params["be3"],
        params["w4"], params["b4"],
    )

    def full_spec(arr):
        # Full-array block, constant index_map -> stays resident in VMEM.
        return pl.BlockSpec(arr.shape, lambda i: (0, 0))

    in_specs = [pl.BlockSpec((tb, din), lambda i: (i, 0))]   # x unpadded: last dim = full
    in_specs += [full_spec(a) for a in weight_args]
    # Lane-dense packed Q output: each tile writes one (1, tb) row segment.
    out_spec = pl.BlockSpec((1, tb), lambda i: (0, i))

    flops = 2 * bp * (din * h0_p + h0_p * h0_p + h0_p * h1_p + h1_p)
    bytes_accessed = (
        sum(int(a.size) * a.dtype.itemsize for a in weight_args)
        + bp * din * 4 + bp * 4
    )
    cost = pl.CostEstimate(flops=int(flops),
                           transcendentals=int(3 * bp),
                           bytes_accessed=int(bytes_accessed))

    kernel = functools.partial(softq_kernel, dims["h0"], dims["h1"])

    q_row = pl.pallas_call(
        kernel,
        out_shape=jax.ShapeDtypeStruct((1, bp), jnp.float32),
        grid=grid,
        in_specs=in_specs,
        out_specs=out_spec,
        compiler_params=pltpu.CompilerParams(dimension_semantics=("parallel",)),
        cost_estimate=cost,
    )(x, *weight_args)

    return q_row[0, :B].reshape(B, 1)


def init_params(key, num_inputs, num_actions, hidden_size=(400, 300), init_w=0.003):
    """Mirrors the PyTorch init (nn.Linear defaults; linear4 uniform(-init_w, init_w);
    LayerNorm gamma=1, beta=0).  Hidden weights stored (in, out) bf16, zero-padded to
    128-multiples on the output dim only; w1 keeps its real `din` rows; the Q head is
    a (1, h1_p) row.  Biases / LN params stay f32 with zero padding."""
    h0, h1 = hidden_size
    din = num_inputs + num_actions
    h0_p, h1_p = _round_up(h0, 128), _round_up(h1, 128)

    ks = jax.random.split(key, 8)

    def linear(kw, kb, fan_in, fan_out, in_pad, out_pad, bound=None):
        if bound is None:
            bound = 1.0 / (float(fan_in) ** 0.5)
        w = jax.random.uniform(kw, (fan_in, fan_out), jnp.float32, -bound, bound)
        b = jax.random.uniform(kb, (fan_out,), jnp.float32, -bound, bound)
        w_p = jnp.zeros((in_pad, out_pad), jnp.float32).at[:fan_in, :fan_out].set(w)
        b_p = jnp.zeros((1, out_pad), jnp.float32).at[0, :fan_out].set(b)
        return w_p.astype(jnp.bfloat16), b_p

    def layer_norm_params(real, padded):
        g = jnp.zeros((1, padded), jnp.float32).at[0, :real].set(1.0)
        b = jnp.zeros((1, padded), jnp.float32)
        return g, b

    w1, b1 = linear(ks[0], ks[1], din, h0, din, h0_p)          # real-row w1 (din, h0_p)
    w2, b2 = linear(ks[2], ks[3], h0, h0, h0_p, h0_p)
    w3, b3 = linear(ks[4], ks[5], h0, h1, h0_p, h1_p)

    # Q head as a (1, h1_p) row; bias as a (1, 1) scalar block.
    w4r = jax.random.uniform(ks[6], (h1,), jnp.float32, -init_w, init_w)
    b4r = jax.random.uniform(ks[7], (1,), jnp.float32, -init_w, init_w)
    w4 = jnp.zeros((1, h1_p), jnp.float32).at[0, :h1].set(w4r).astype(jnp.bfloat16)
    b4 = b4r.reshape(1, 1)

    g1, be1 = layer_norm_params(h0, h0_p)
    g2, be2 = layer_norm_params(h0, h0_p)   # actual width of linear2's output
    g3, be3 = layer_norm_params(h1, h1_p)

    return dict(
        w1=w1, b1=b1, g1=g1, be1=be1,
        w2=w2, b2=b2, g2=g2, be2=be2,
        w3=w3, b3=b3, g3=g3, be3=be3,
        w4=w4, b4=b4,
        dims=dict(din=din, h0=h0, h0_p=h0_p, h1=h1, h1_p=h1_p),
    )


def reference_forward(x, params):
    """Pure-JAX reference mirroring the kernel semantics (same bf16 weights, f32 LN,
    but classic two-pass centered variance to cross-check the E[x^2]-mean^2 rewrite)."""
    dims = params["dims"]
    bf16, f32 = jnp.bfloat16, jnp.float32

    def ln(h, g, b, n_real):
        col = jnp.arange(h.shape[-1])[None, :]
        mean = jnp.sum(h, axis=-1, keepdims=True) / n_real
        diff = jnp.where(col < n_real, h - mean, 0.0)
        var = jnp.sum(diff * diff, axis=-1, keepdims=True) / n_real
        return (h - mean) * jax.lax.rsqrt(var + LN_EPS) * g + b

    h = jnp.maximum(jnp.dot(x.astype(bf16), params["w1"], preferred_element_type=f32) + params["b1"], 0.0)
    h = ln(h, params["g1"], params["be1"], dims["h0"])
    h = jnp.maximum(jnp.dot(h.astype(bf16), params["w2"], preferred_element_type=f32) + params["b2"], 0.0)
    h = ln(h, params["g2"], params["be2"], dims["h0"])
    h = jnp.maximum(jnp.dot(h.astype(bf16), params["w3"], preferred_element_type=f32) + params["b3"], 0.0)
    h = ln(h, params["g3"], params["be3"], dims["h1"])
    q = jnp.dot(h.astype(bf16), params["w4"].T, preferred_element_type=f32) + params["b4"]
    return q


if __name__ == "__main__":
    key = jax.random.PRNGKey(0)
    k_param, k_state = jax.random.split(key)

    batch = 8
    num_inputs = 32
    num_actions = 8
    hidden_size = (400, 300)   # module defaults -> hidden dims padded to (512, 384) internally

    params = init_params(k_param, num_inputs, num_actions, hidden_size)
    # SoftQNetwork.forward takes the already-concatenated [state, action] vector.
    x = jax.random.normal(k_state, (batch, num_inputs + num_actions), jnp.float32)

    q = softq_forward(x, params)
    jax.block_until_ready(q)

    q_ref = reference_forward(x, params)
    assert q.shape == (batch, 1), q.shape
    assert jnp.allclose(q, q_ref, atol=2e-3, rtol=2e-3), (q, q_ref)

    print("KERNEL_OK")
</pallas_src>

<mosaic_0001>
module attributes {stable_mosaic.version = 11 : i64} {
  func.func @softq_kernel(%arg0: i32, %arg1: memref<8x40xf32, #tpu.memory_space<vmem>>, %arg2: memref<40x512xbf16, #tpu.memory_space<vmem>>, %arg3: memref<1x512xf32, #tpu.memory_space<vmem>>, %arg4: memref<1x512xf32, #tpu.memory_space<vmem>>, %arg5: memref<1x512xf32, #tpu.memory_space<vmem>>, %arg6: memref<512x512xbf16, #tpu.memory_space<vmem>>, %arg7: memref<1x512xf32, #tpu.memory_space<vmem>>, %arg8: memref<1x512xf32, #tpu.memory_space<vmem>>, %arg9: memref<1x512xf32, #tpu.memory_space<vmem>>, %arg10: memref<512x384xbf16, #tpu.memory_space<vmem>>, %arg11: memref<1x384xf32, #tpu.memory_space<vmem>>, %arg12: memref<1x384xf32, #tpu.memory_space<vmem>>, %arg13: memref<1x384xf32, #tpu.memory_space<vmem>>, %arg14: memref<1x384xbf16, #tpu.memory_space<vmem>>, %arg15: memref<1x1xf32, #tpu.memory_space<vmem>>, %arg16: memref<1x8xf32, #tpu.memory_space<vmem>>) attributes {dimension_semantics = [#tpu.dimension_semantics<parallel>], iteration_bounds = array<i64: 1>, scalar_prefetch = 0 : i64, scratch_operands = 0 : i64, tpu.core_type = #tpu.core_type<tc>, window_params = [{transform_indices = @transform_0, window_bounds = array<i64: 8, 40>}, {pipeline_mode = #tpu.pipeline_mode<synchronous>, transform_indices = @transform_1, window_bounds = array<i64: 40, 512>}, {pipeline_mode = #tpu.pipeline_mode<synchronous>, transform_indices = @transform_2, window_bounds = array<i64: 1, 512>}, {pipeline_mode = #tpu.pipeline_mode<synchronous>, transform_indices = @transform_3, window_bounds = array<i64: 1, 512>}, {pipeline_mode = #tpu.pipeline_mode<synchronous>, transform_indices = @transform_4, window_bounds = array<i64: 1, 512>}, {pipeline_mode = #tpu.pipeline_mode<synchronous>, transform_indices = @transform_5, window_bounds = array<i64: 512, 512>}, {pipeline_mode = #tpu.pipeline_mode<synchronous>, transform_indices = @transform_6, window_bounds = array<i64: 1, 512>}, {pipeline_mode = #tpu.pipeline_mode<synchronous>, transform_indices = @transform_7, window_bounds = array<i64: 1, 512>}, {pipeline_mode = #tpu.pipeline_mode<synchronous>, transform_indices = @transform_8, window_bounds = array<i64: 1, 512>}, {pipeline_mode = #tpu.pipeline_mode<synchronous>, transform_indices = @transform_9, window_bounds = array<i64: 512, 384>}, {pipeline_mode = #tpu.pipeline_mode<synchronous>, transform_indices = @transform_10, window_bounds = array<i64: 1, 384>}, {pipeline_mode = #tpu.pipeline_mode<synchronous>, transform_indices = @transform_11, window_bounds = array<i64: 1, 384>}, {pipeline_mode = #tpu.pipeline_mode<synchronous>, transform_indices = @transform_12, window_bounds = array<i64: 1, 384>}, {pipeline_mode = #tpu.pipeline_mode<synchronous>, transform_indices = @transform_13, window_bounds = array<i64: 1, 384>}, {pipeline_mode = #tpu.pipeline_mode<synchronous>, transform_indices = @transform_14, window_bounds = array<i64: 1, 1>}, {transform_indices = @transform_15, window_bounds = array<i64: 1, 8>}]} {
    %c0 = arith.constant 0 : index
    %c0_0 = arith.constant 0 : index
    %0 = vector.load %arg1[%c0, %c0_0] : memref<8x40xf32, #tpu.memory_space<vmem>>, vector<8x40xf32>
    %1 = arith.truncf %0 : vector<8x40xf32> to vector<8x40xbf16>
    %c0_1 = arith.constant 0 : index
    %c0_2 = arith.constant 0 : index
    %2 = vector.load %arg2[%c0_1, %c0_2] : memref<40x512xbf16, #tpu.memory_space<vmem>>, vector<40x512xbf16>
    %cst = arith.constant dense<0.000000e+00> : vector<8x512xf32>
    %3 = tpu.matmul %1, %2, %cst {dimension_numbers = #tpu.dot_dimension_numbers<[1], [0], [0], [1], [0, 0, 1, 1], [], []>} : vector<8x40xbf16>, vector<40x512xbf16>, vector<8x512xf32> -> vector<8x512xf32>
    %c0_3 = arith.constant 0 : index
    %c0_4 = arith.constant 0 : index
    %4 = vector.load %arg3[%c0_3, %c0_4] : memref<1x512xf32, #tpu.memory_space<vmem>>, vector<1x512xf32>
    %5 = vector.broadcast %4 : vector<1x512xf32> to vector<8x512xf32>
    %6 = arith.addf %3, %5 : vector<8x512xf32>
    %cst_5 = arith.constant 0.000000e+00 : f32
    %7 = vector.broadcast %cst_5 : f32 to vector<8x512xf32>
    %8 = arith.maximumf %6, %7 : vector<8x512xf32>
    %c0_6 = arith.constant 0 : index
    %c0_7 = arith.constant 0 : index
    %9 = vector.load %arg4[%c0_6, %c0_7] : memref<1x512xf32, #tpu.memory_space<vmem>>, vector<1x512xf32>
    %c0_8 = arith.constant 0 : index
    %c0_9 = arith.constant 0 : index
    %10 = vector.load %arg5[%c0_8, %c0_9] : memref<1x512xf32, #tpu.memory_space<vmem>>, vector<1x512xf32>
    %cst_10 = arith.constant dense<0.000000e+00> : vector<8xf32>
    %11 = vector.multi_reduction <add>, %8, %cst_10 [1] : vector<8x512xf32> to vector<8xf32>
    %12 = vector.shape_cast %11 : vector<8xf32> to vector<8x1xf32>
    %cst_11 = arith.constant 2.500000e-03 : f32
    %13 = vector.broadcast %cst_11 : f32 to vector<8x1xf32>
    %14 = arith.mulf %12, %13 : vector<8x1xf32>
    %15 = arith.mulf %8, %8 : vector<8x512xf32>
    %cst_12 = arith.constant dense<0.000000e+00> : vector<8xf32>
    %16 = vector.multi_reduction <add>, %15, %cst_12 [1] : vector<8x512xf32> to vector<8xf32>
    %17 = vector.shape_cast %16 : vector<8xf32> to vector<8x1xf32>
    %cst_13 = arith.constant 2.500000e-03 : f32
    %18 = vector.broadcast %cst_13 : f32 to vector<8x1xf32>
    %19 = arith.mulf %17, %18 : vector<8x1xf32>
    %20 = arith.mulf %14, %14 : vector<8x1xf32>
    %21 = arith.subf %19, %20 : vector<8x1xf32>
    %cst_14 = arith.constant 9.99999974E-6 : f32
    %22 = vector.broadcast %cst_14 : f32 to vector<8x1xf32>
    %23 = arith.addf %21, %22 : vector<8x1xf32>
    %24 = math.rsqrt %23 : vector<8x1xf32>
    %25 = vector.broadcast %14 : vector<8x1xf32> to vector<8x512xf32>
    %26 = arith.subf %8, %25 : vector<8x512xf32>
    %27 = vector.broadcast %24 : vector<8x1xf32> to vector<8x512xf32>
    %28 = arith.mulf %26, %27 : vector<8x512xf32>
    %29 = vector.broadcast %9 : vector<1x512xf32> to vector<8x512xf32>
    %30 = arith.mulf %28, %29 : vector<8x512xf32>
    %31 = vector.broadcast %10 : vector<1x512xf32> to vector<8x512xf32>
    %32 = arith.addf %30, %31 : vector<8x512xf32>
    %33 = arith.truncf %32 : vector<8x512xf32> to vector<8x512xbf16>
    %c0_15 = arith.constant 0 : index
    %c0_16 = arith.constant 0 : index
    %34 = vector.load %arg6[%c0_15, %c0_16] : memref<512x512xbf16, #tpu.memory_space<vmem>>, vector<512x512xbf16>
    %cst_17 = arith.constant dense<0.000000e+00> : vector<8x512xf32>
    %35 = tpu.matmul %33, %34, %cst_17 {dimension_numbers = #tpu.dot_dimension_numbers<[1], [0], [0], [1], [0, 0, 1, 1], [], []>} : vector<8x512xbf16>, vector<512x512xbf16>, vector<8x512xf32> -> vector<8x512xf32>
    %c0_18 = arith.constant 0 : index
    %c0_19 = arith.constant 0 : index
    %36 = vector.load %arg7[%c0_18, %c0_19] : memref<1x512xf32, #tpu.memory_space<vmem>>, vector<1x512xf32>
    %37 = vector.broadcast %36 : vector<1x512xf32> to vector<8x512xf32>
    %38 = arith.addf %35, %37 : vector<8x512xf32>
    %cst_20 = arith.constant 0.000000e+00 : f32
    %39 = vector.broadcast %cst_20 : f32 to vector<8x512xf32>
    %40 = arith.maximumf %38, %39 : vector<8x512xf32>
    %c0_21 = arith.constant 0 : index
    %c0_22 = arith.constant 0 : index
    %41 = vector.load %arg8[%c0_21, %c0_22] : memref<1x512xf32, #tpu.memory_space<vmem>>, vector<1x512xf32>
    %c0_23 = arith.constant 0 : index
    %c0_24 = arith.constant 0 : index
    %42 = vector.load %arg9[%c0_23, %c0_24] : memref<1x512xf32, #tpu.memory_space<vmem>>, vector<1x512xf32>
    %cst_25 = arith.constant dense<0.000000e+00> : vector<8xf32>
    %43 = vector.multi_reduction <add>, %40, %cst_25 [1] : vector<8x512xf32> to vector<8xf32>
    %44 = vector.shape_cast %43 : vector<8xf32> to vector<8x1xf32>
    %cst_26 = arith.constant 2.500000e-03 : f32
    %45 = vector.broadcast %cst_26 : f32 to vector<8x1xf32>
    %46 = arith.mulf %44, %45 : vector<8x1xf32>
    %47 = arith.mulf %40, %40 : vector<8x512xf32>
    %cst_27 = arith.constant dense<0.000000e+00> : vector<8xf32>
    %48 = vector.multi_reduction <add>, %47, %cst_27 [1] : vector<8x512xf32> to vector<8xf32>
    %49 = vector.shape_cast %48 : vector<8xf32> to vector<8x1xf32>
    %cst_28 = arith.constant 2.500000e-03 : f32
    %50 = vector.broadcast %cst_28 : f32 to vector<8x1xf32>
    %51 = arith.mulf %49, %50 : vector<8x1xf32>
    %52 = arith.mulf %46, %46 : vector<8x1xf32>
    %53 = arith.subf %51, %52 : vector<8x1xf32>
    %cst_29 = arith.constant 9.99999974E-6 : f32
    %54 = vector.broadcast %cst_29 : f32 to vector<8x1xf32>
    %55 = arith.addf %53, %54 : vector<8x1xf32>
    %56 = math.rsqrt %55 : vector<8x1xf32>
    %57 = vector.broadcast %46 : vector<8x1xf32> to vector<8x512xf32>
    %58 = arith.subf %40, %57 : vector<8x512xf32>
    %59 = vector.broadcast %56 : vector<8x1xf32> to vector<8x512xf32>
    %60 = arith.mulf %58, %59 : vector<8x512xf32>
    %61 = vector.broadcast %41 : vector<1x512xf32> to vector<8x512xf32>
    %62 = arith.mulf %60, %61 : vector<8x512xf32>
    %63 = vector.broadcast %42 : vector<1x512xf32> to vector<8x512xf32>
    %64 = arith.addf %62, %63 : vector<8x512xf32>
    %65 = arith.truncf %64 : vector<8x512xf32> to vector<8x512xbf16>
    %c0_30 = arith.constant 0 : index
    %c0_31 = arith.constant 0 : index
    %66 = vector.load %arg10[%c0_30, %c0_31] : memref<512x384xbf16, #tpu.memory_space<vmem>>, vector<512x384xbf16>
    %cst_32 = arith.constant dense<0.000000e+00> : vector<8x384xf32>
    %67 = tpu.matmul %65, %66, %cst_32 {dimension_numbers = #tpu.dot_dimension_numbers<[1], [0], [0], [1], [0, 0, 1, 1], [], []>} : vector<8x512xbf16>, vector<512x384xbf16>, vector<8x384xf32> -> vector<8x384xf32>
    %c0_33 = arith.constant 0 : index
    %c0_34 = arith.constant 0 : index
    %68 = vector.load %arg11[%c0_33, %c0_34] : memref<1x384xf32, #tpu.memory_space<vmem>>, vector<1x384xf32>
    %69 = vector.broadcast %68 : vector<1x384xf32> to vector<8x384xf32>
    %70 = arith.addf %67, %69 : vector<8x384xf32>
    %cst_35 = arith.constant 0.000000e+00 : f32
    %71 = vector.broadcast %cst_35 : f32 to vector<8x384xf32>
    %72 = arith.maximumf %70, %71 : vector<8x384xf32>
    %c0_36 = arith.constant 0 : index
    %c0_37 = arith.constant 0 : index
    %73 = vector.load %arg12[%c0_36, %c0_37] : memref<1x384xf32, #tpu.memory_space<vmem>>, vector<1x384xf32>
    %c0_38 = arith.constant 0 : index
    %c0_39 = arith.constant 0 : index
    %74 = vector.load %arg13[%c0_38, %c0_39] : memref<1x384xf32, #tpu.memory_space<vmem>>, vector<1x384xf32>
    %cst_40 = arith.constant dense<0.000000e+00> : vector<8xf32>
    %75 = vector.multi_reduction <add>, %72, %cst_40 [1] : vector<8x384xf32> to vector<8xf32>
    %76 = vector.shape_cast %75 : vector<8xf32> to vector<8x1xf32>
    %cst_41 = arith.constant 0.00333333341 : f32
    %77 = vector.broadcast %cst_41 : f32 to vector<8x1xf32>
    %78 = arith.mulf %76, %77 : vector<8x1xf32>
    %79 = arith.mulf %72, %72 : vector<8x384xf32>
    %cst_42 = arith.constant dense<0.000000e+00> : vector<8xf32>
    %80 = vector.multi_reduction <add>, %79, %cst_42 [1] : vector<8x384xf32> to vector<8xf32>
    %81 = vector.shape_cast %80 : vector<8xf32> to vector<8x1xf32>
    %cst_43 = arith.constant 0.00333333341 : f32
    %82 = vector.broadcast %cst_43 : f32 to vector<8x1xf32>
    %83 = arith.mulf %81, %82 : vector<8x1xf32>
    %84 = arith.mulf %78, %78 : vector<8x1xf32>
    %85 = arith.subf %83, %84 : vector<8x1xf32>
    %cst_44 = arith.constant 9.99999974E-6 : f32
    %86 = vector.broadcast %cst_44 : f32 to vector<8x1xf32>
    %87 = arith.addf %85, %86 : vector<8x1xf32>
    %88 = math.rsqrt %87 : vector<8x1xf32>
    %89 = vector.broadcast %78 : vector<8x1xf32> to vector<8x384xf32>
    %90 = arith.subf %72, %89 : vector<8x384xf32>
    %91 = vector.broadcast %88 : vector<8x1xf32> to vector<8x384xf32>
    %92 = arith.mulf %90, %91 : vector<8x384xf32>
    %93 = vector.broadcast %73 : vector<1x384xf32> to vector<8x384xf32>
    %94 = arith.mulf %92, %93 : vector<8x384xf32>
    %95 = vector.broadcast %74 : vector<1x384xf32> to vector<8x384xf32>
    %96 = arith.addf %94, %95 : vector<8x384xf32>
    %c0_45 = arith.constant 0 : index
    %c0_46 = arith.constant 0 : index
    %97 = vector.load %arg14[%c0_45, %c0_46] : memref<1x384xbf16, #tpu.memory_space<vmem>>, vector<1x384xbf16>
    %98 = arith.truncf %96 : vector<8x384xf32> to vector<8x384xbf16>
    %cst_47 = arith.constant dense<0.000000e+00> : vector<1x8xf32>
    %99 = tpu.matmul %97, %98, %cst_47 {dimension_numbers = #tpu.dot_dimension_numbers<[1], [1], [0], [0], [0, 0, 1, 0], [], []>} : vector<1x384xbf16>, vector<8x384xbf16>, vector<1x8xf32> -> vector<1x8xf32>
    %c0_48 = arith.constant 0 : index
    %c0_49 = arith.constant 0 : index
    %100 = vector.load %arg15[%c0_48, %c0_49] : memref<1x1xf32, #tpu.memory_space<vmem>>, vector<1x1xf32>
    %101 = vector.broadcast %100 : vector<1x1xf32> to vector<1x8xf32>
    %102 = arith.addf %99, %101 : vector<1x8xf32>
    %c0_50 = arith.constant 0 : index
    %c0_51 = arith.constant 0 : index
    %103 = vector.load %arg16[%c0_50, %c0_51] : memref<1x8xf32, #tpu.memory_space<vmem>>, vector<1x8xf32>
    tpu.vector_store %arg16[%c0_50, %c0_51], %102 {strides = array<i32>} : memref<1x8xf32, #tpu.memory_space<vmem>>, vector<1x8xf32>,
    return
  }
  func.func @transform_0(%arg0: i32) -> (i32, i32) {
    %c0_i32 = arith.constant 0 : i32
    %c0_i32_0 = arith.constant 0 : i32
    return %arg0, %c0_i32 : i32, i32
  }
  func.func @transform_1(%arg0: i32) -> (i32, i32) {
    %c0_i32 = arith.constant 0 : i32
    %c0_i32_0 = arith.constant 0 : i32
    %c0_i32_1 = arith.constant 0 : i32
    return %c0_i32, %c0_i32_0 : i32, i32
  }
  func.func @transform_2(%arg0: i32) -> (i32, i32) {
    %c0_i32 = arith.constant 0 : i32
    %c0_i32_0 = arith.constant 0 : i32
    %c0_i32_1 = arith.constant 0 : i32
    return %c0_i32, %c0_i32_0 : i32, i32
  }
  func.func @transform_3(%arg0: i32) -> (i32, i32) {
    %c0_i32 = arith.constant 0 : i32
    %c0_i32_0 = arith.constant 0 : i32
    %c0_i32_1 = arith.constant 0 : i32
    return %c0_i32, %c0_i32_0 : i32, i32
  }
  func.func @transform_4(%arg0: i32) -> (i32, i32) {
    %c0_i32 = arith.constant 0 : i32
    %c0_i32_0 = arith.constant 0 : i32
    %c0_i32_1 = arith.constant 0 : i32
    return %c0_i32, %c0_i32_0 : i32, i32
  }
  func.func @transform_5(%arg0: i32) -> (i32, i32) {
    %c0_i32 = arith.constant 0 : i32
    %c0_i32_0 = arith.constant 0 : i32
    %c0_i32_1 = arith.constant 0 : i32
    return %c0_i32, %c0_i32_0 : i32, i32
  }
  func.func @transform_6(%arg0: i32) -> (i32, i32) {
    %c0_i32 = arith.constant 0 : i32
    %c0_i32_0 = arith.constant 0 : i32
    %c0_i32_1 = arith.constant 0 : i32
    return %c0_i32, %c0_i32_0 : i32, i32
  }
  func.func @transform_7(%arg0: i32) -> (i32, i32) {
    %c0_i32 = arith.constant 0 : i32
    %c0_i32_0 = arith.constant 0 : i32
    %c0_i32_1 = arith.constant 0 : i32
    return %c0_i32, %c0_i32_0 : i32, i32
  }
  func.func @transform_8(%arg0: i32) -> (i32, i32) {
    %c0_i32 = arith.constant 0 : i32
    %c0_i32_0 = arith.constant 0 : i32
    %c0_i32_1 = arith.constant 0 : i32
    return %c0_i32, %c0_i32_0 : i32, i32
  }
  func.func @transform_9(%arg0: i32) -> (i32, i32) {
    %c0_i32 = arith.constant 0 : i32
    %c0_i32_0 = arith.constant 0 : i32
    %c0_i32_1 = arith.constant 0 : i32
    return %c0_i32, %c0_i32_0 : i32, i32
  }
  func.func @transform_10(%arg0: i32) -> (i32, i32) {
    %c0_i32 = arith.constant 0 : i32
    %c0_i32_0 = arith.constant 0 : i32
    %c0_i32_1 = arith.constant 0 : i32
    return %c0_i32, %c0_i32_0 : i32, i32
  }
  func.func @transform_11(%arg0: i32) -> (i32, i32) {
    %c0_i32 = arith.constant 0 : i32
    %c0_i32_0 = arith.constant 0 : i32
    %c0_i32_1 = arith.constant 0 : i32
    return %c0_i32, %c0_i32_0 : i32, i32
  }
  func.func @transform_12(%arg0: i32) -> (i32, i32) {
    %c0_i32 = arith.constant 0 : i32
    %c0_i32_0 = arith.constant 0 : i32
    %c0_i32_1 = arith.constant 0 : i32
    return %c0_i32, %c0_i32_0 : i32, i32
  }
  func.func @transform_13(%arg0: i32) -> (i32, i32) {
    %c0_i32 = arith.constant 0 : i32
    %c0_i32_0 = arith.constant 0 : i32
    %c0_i32_1 = arith.constant 0 : i32
    return %c0_i32, %c0_i32_0 : i32, i32
  }
  func.func @transform_14(%arg0: i32) -> (i32, i32) {
    %c0_i32 = arith.constant 0 : i32
    %c0_i32_0 = arith.constant 0 : i32
    %c0_i32_1 = arith.constant 0 : i32
    return %c0_i32, %c0_i32_0 : i32, i32
  }
  func.func @transform_15(%arg0: i32) -> (i32, i32) {
    %c0_i32 = arith.constant 0 : i32
    %c0_i32_0 = arith.constant 0 : i32
    return %c0_i32, %arg0 : i32, i32
  }
}

</mosaic_0001>

<llo_original>
// kernel: tpu_custom_call.1
$region0: #{tpu_custom_call.1}
  #allocation0 [shape = 'u32[]', space=smem, size = 0x4, offset = 0x4, fixed_abs, tag = 'smem constant byte address 0x4 - core index']
  #allocation1 [shape = 'u32[72,128]{1,0:T(1,128)}', space=vmem, size = 0x9000, scoped, tag = 'internal scratch']
  #allocation2 [shape = 'f32[1,1]{1,0:T(1,128)S(1)}', space=vmem, size = 0x200, scoped, tag = 'scoped memory for tpu_custom_call.1']
  %s0 = inlined_call_operand.hbm [shape: f32[8,40], index: 0, kind: input, shape index: {}]
  %s1 = inlined_call_operand.hbm [shape: bf16[40,512], index: 1, kind: input, shape index: {}]
  %s2 = inlined_call_operand.hbm [shape: f32[1,512], index: 2, kind: input, shape index: {}]
  %s3 = inlined_call_operand.vmem [shape: f32[1,512], index: 3, kind: input, shape index: {}]
  %s4 = inlined_call_operand.hbm [shape: f32[1,512], index: 4, kind: input, shape index: {}]
  %s5 = inlined_call_operand.hbm [shape: bf16[512,512], index: 5, kind: input, shape index: {}]
  %s6 = inlined_call_operand.hbm [shape: f32[1,512], index: 6, kind: input, shape index: {}]
  %s7 = inlined_call_operand.vmem [shape: f32[1,512], index: 7, kind: input, shape index: {}]
  %s8 = inlined_call_operand.hbm [shape: f32[1,512], index: 8, kind: input, shape index: {}]
  %s9 = inlined_call_operand.hbm [shape: bf16[512,384], index: 9, kind: input, shape index: {}]
  %s10 = inlined_call_operand.vmem [shape: f32[1,384], index: 10, kind: input, shape index: {}]
  %s11 = inlined_call_operand.hbm [shape: f32[1,384], index: 11, kind: input, shape index: {}]
  %s12 = inlined_call_operand.hbm [shape: f32[1,384], index: 12, kind: input, shape index: {}]
  %s13 = inlined_call_operand.vmem [shape: bf16[1,384], index: 13, kind: input, shape index: {}]
  %s14 = inlined_call_operand.<no memory space> [shape: f32[1,1], index: 14, kind: input, shape index: {}]
  %s15 = inlined_call_operand.hbm [shape: f32[1,8], index: 15, kind: output, shape index: {}]
  %s16 = sld [smem:[#allocation0]]
  $region110: #{tpu_custom_call.1} parent=0
    _
  %s18 = ssub.s32 1, %s16
  %s19 = scalar_select 0, %s18, %s16
  %v20 = vstv %s14
  %21 = vst [vmem:[#allocation2] sm:$0x1] %v20
  $region1: #{tpu_custom_call.1} parent=0
    #allocation3 [shape = 'u8[4096]{0}', space=vmem, size = 0x1000, scoped, tag = 'input window, operand 0, single buffered']
    #allocation4 [shape = 's32[1]{0}', space=sflag, size = 0x4, scoped, tag = 'scoped memory for tpu_custom_call.1']
    #allocation5 [shape = 's32[1]{0}', space=sflag, size = 0x4, scoped, tag = 'scoped memory for tpu_custom_call.1']
    #allocation6 [shape = 'u8[40960]{0}', space=vmem, size = 0xa000, scoped, tag = 'input window, operand 1, single buffered']
    #allocation7 [shape = 's32[1]{0}', space=sflag, size = 0x4, scoped, tag = 'scoped memory for tpu_custom_call.1']
    #allocation8 [shape = 'u8[2048]{0}', space=vmem, size = 0x800, scoped, tag = 'input window, operand 2, single buffered']
    #allocation9 [shape = 'u8[2048]{0}', space=vmem, size = 0x800, scoped, tag = 'input window, operand 4, single buffered']
    #allocation10 [shape = 's32[1]{0}', space=sflag, size = 0x4, scoped, tag = 'scoped memory for tpu_custom_call.1']
    #allocation11 [shape = 'u8[524288]{0}', space=vmem, size = 0x80000, scoped, tag = 'input window, operand 5, single buffered']
    #allocation12 [shape = 'u8[2048]{0}', space=vmem, size = 0x800, scoped, tag = 'input window, operand 6, single buffered']
    #allocation13 [shape = 's32[1]{0}', space=sflag, size = 0x4, scoped, tag = 'scoped memory for tpu_custom_call.1']
    #allocation14 [shape = 'u8[2048]{0}', space=vmem, size = 0x800, scoped, tag = 'input window, operand 8, single buffered']
    #allocation15 [shape = 'u8[393216]{0}', space=vmem, size = 0x60000, scoped, tag = 'input window, operand 9, single buffered']
    #allocation16 [shape = 's32[1]{0}', space=sflag, size = 0x4, scoped, tag = 'scoped memory for tpu_custom_call.1']
    #allocation17 [shape = 'u8[1536]{0}', space=vmem, size = 0x800, scoped, tag = 'input window, operand 11, single buffered']
    #allocation18 [shape = 'u8[1536]{0}', space=vmem, size = 0x800, scoped, tag = 'input window, operand 12, single buffered']
    #allocation19 [shape = 's32[1]{0}', space=sflag, size = 0x4, scoped, tag = 'scoped memory for tpu_custom_call.1']
    #allocation20 [shape = 'u8[512]{0}', space=vmem, size = 0x400, scoped, tag = 'output window, operand 0, single buffered']
    %22 = vsyncpa [#allocation4], 0
    %23 = vsyncpa [#allocation7], 0
    %24 = vsyncpa [#allocation10], 0
    %25 = vsyncpa [#allocation13], 0
    %26 = vsyncpa [#allocation16], 0
    %27 = vsyncpa [#allocation19], 0
    %28 = vsyncpa [#allocation5], 0
    // Predicated region
    $region2: #{tpu_custom_call.1} parent=1 // pred_check
      _
    $region3: #{tpu_custom_call.1} parent=1 // pred_check_branch
      %30 = sbr.rel (0) target = $region5
    $region4: #{tpu_custom_call.1} parent=1 // pred_region
      %32 = vsyncadd [#allocation4], 0
      %s34 = sshll.u32 %s0, 4
      %s35 = int_to_ptr.hbm [resolvable:$true] %s34
      %s36 = sshll.u32 [#allocation3], 4
      %s37 = int_to_ptr.vmem [resolvable:$true] %s36
      %39 = dma.hbm_to_vmem [thread:$0]  %s35, 128, %s37, [#allocation4]
    $region5: #{tpu_custom_call.1} parent=1 // pred_fallthru
      _
    // Predicated region
    $region6: #{tpu_custom_call.1} parent=1 // pred_check
      _
    $region7: #{tpu_custom_call.1} parent=1 // pred_check_branch
      %41 = sbr.rel (0) target = $region9
    $region8: #{tpu_custom_call.1} parent=1 // pred_region
      %43 = vsyncadd [#allocation7], 0
      %s44 = sshll.u32 %s1, 4
      %s45 = int_to_ptr.hbm [resolvable:$true] %s44
      %s46 = sshll.u32 [#allocation6], 4
      %s47 = int_to_ptr.vmem [resolvable:$true] %s46
      %52 = dma.hbm_to_vmem [thread:$0]  %s45, 1280, %s47, [#allocation7], 256, 256, 16
    $region9: #{tpu_custom_call.1} parent=1 // pred_fallthru
      _
    // Predicated region
    $region10: #{tpu_custom_call.1} parent=1 // pred_check
      _
    $region11: #{tpu_custom_call.1} parent=1 // pred_check_branch
      %54 = sbr.rel (0) target = $region13
    $region12: #{tpu_custom_call.1} parent=1 // pred_region
      %56 = vsyncadd [#allocation7], 0
      %s58 = sshll.u32 %s2, 4
      %s59 = int_to_ptr.hbm [resolvable:$true] %s58
      %s60 = sshll.u32 [#allocation8], 4
      %s61 = int_to_ptr.vmem [resolvable:$true] %s60
      %63 = dma.hbm_to_vmem [thread:$0]  %s59, 64, %s61, [#allocation7]
    $region13: #{tpu_custom_call.1} parent=1 // pred_fallthru
      _
    // Predicated region
    $region14: #{tpu_custom_call.1} parent=1 // pred_check
      _
    $region15: #{tpu_custom_call.1} parent=1 // pred_check_branch
      %65 = sbr.rel (0) target = $region17
    $region16: #{tpu_custom_call.1} parent=1 // pred_region
      _
    $region17: #{tpu_custom_call.1} parent=1 // pred_fallthru
      _
    // Predicated region
    $region18: #{tpu_custom_call.1} parent=1 // pred_check
      _
    $region19: #{tpu_custom_call.1} parent=1 // pred_check_branch
      %67 = sbr.rel (0) target = $region21
    $region20: #{tpu_custom_call.1} parent=1 // pred_region
      %69 = vsyncadd [#allocation10], 0
      %s71 = sshll.u32 %s4, 4
      %s72 = int_to_ptr.hbm [resolvable:$true] %s71
      %s73 = sshll.u32 [#allocation9], 4
      %s74 = int_to_ptr.vmem [resolvable:$true] %s73
      %76 = dma.hbm_to_vmem [thread:$0]  %s72, 64, %s74, [#allocation10]
    $region21: #{tpu_custom_call.1} parent=1 // pred_fallthru
      _
    // Predicated region
    $region22: #{tpu_custom_call.1} parent=1 // pred_check
      _
    $region23: #{tpu_custom_call.1} parent=1 // pred_check_branch
      %78 = sbr.rel (0) target = $region25
    $region24: #{tpu_custom_call.1} parent=1 // pred_region
      %80 = vsyncadd [#allocation10], 0
      %s81 = sshll.u32 %s5, 4
      %s82 = int_to_ptr.hbm [resolvable:$true] %s81
      %s83 = sshll.u32 [#allocation11], 4
      %s84 = int_to_ptr.vmem [resolvable:$true] %s83
      %89 = dma.hbm_to_vmem [thread:$0]  %s82, 16384, %s84, [#allocation10], 256, 256, 16
    $region25: #{tpu_custom_call.1} parent=1 // pred_fallthru
      _
    // Predicated region
    $region26: #{tpu_custom_call.1} parent=1 // pred_check
      _
    $region27: #{tpu_custom_call.1} parent=1 // pred_check_branch
      %91 = sbr.rel (0) target = $region29
    $region28: #{tpu_custom_call.1} parent=1 // pred_region
      %93 = vsyncadd [#allocation13], 0
      %s95 = sshll.u32 %s6, 4
      %s96 = int_to_ptr.hbm [resolvable:$true] %s95
      %s97 = sshll.u32 [#allocation12], 4
      %s98 = int_to_ptr.vmem [resolvable:$true] %s97
      %100 = dma.hbm_to_vmem [thread:$0]  %s96, 64, %s98, [#allocation13]
    $region29: #{tpu_custom_call.1} parent=1 // pred_fallthru
      _
    // Predicated region
    $region30: #{tpu_custom_call.1} parent=1 // pred_check
      _
    $region31: #{tpu_custom_call.1} parent=1 // pred_check_branch
      %102 = sbr.rel (0) target = $region33
    $region32: #{tpu_custom_call.1} parent=1 // pred_region
      _
    $region33: #{tpu_custom_call.1} parent=1 // pred_fallthru
      _
    // Predicated region
    $region34: #{tpu_custom_call.1} parent=1 // pred_check
      _
    $region35: #{tpu_custom_call.1} parent=1 // pred_check_branch
      %104 = sbr.rel (0) target = $region37
    $region36: #{tpu_custom_call.1} parent=1 // pred_region
      %106 = vsyncadd [#allocation13], 0
      %s108 = sshll.u32 %s8, 4
      %s109 = int_to_ptr.hbm [resolvable:$true] %s108
      %s110 = sshll.u32 [#allocation14], 4
      %s111 = int_to_ptr.vmem [resolvable:$true] %s110
      %113 = dma.hbm_to_vmem [thread:$0]  %s109, 64, %s111, [#allocation13]
    $region37: #{tpu_custom_call.1} parent=1 // pred_fallthru
      _
    // Predicated region
    $region38: #{tpu_custom_call.1} parent=1 // pred_check
      _
    $region39: #{tpu_custom_call.1} parent=1 // pred_check_branch
      %115 = sbr.rel (0) target = $region41
    $region40: #{tpu_custom_call.1} parent=1 // pred_region
      %117 = vsyncadd [#allocation16], 0
      %s118 = sshll.u32 %s9, 4
      %s119 = int_to_ptr.hbm [resolvable:$true] %s118
      %s120 = sshll.u32 [#allocation15], 4
      %s121 = int_to_ptr.vmem [resolvable:$true] %s120
      %126 = dma.hbm_to_vmem [thread:$0]  %s119, 12288, %s121, [#allocation16], 192, 192, 12
    $region41: #{tpu_custom_call.1} parent=1 // pred_fallthru
      _
    // Predicated region
    $region42: #{tpu_custom_call.1} parent=1 // pred_check
      _
    $region43: #{tpu_custom_call.1} parent=1 // pred_check_branch
      %128 = sbr.rel (0) target = $region45
    $region44: #{tpu_custom_call.1} parent=1 // pred_region
      _
    $region45: #{tpu_custom_call.1} parent=1 // pred_fallthru
      _
    // Predicated region
    $region46: #{tpu_custom_call.1} parent=1 // pred_check
      _
    $region47: #{tpu_custom_call.1} parent=1 // pred_check_branch
      %130 = sbr.rel (0) target = $region49
    $region48: #{tpu_custom_call.1} parent=1 // pred_region
      %132 = vsyncadd [#allocation16], 0
      %s134 = sshll.u32 %s11, 4
      %s135 = int_to_ptr.hbm [resolvable:$true] %s134
      %s136 = sshll.u32 [#allocation17], 4
      %s137 = int_to_ptr.vmem [resolvable:$true] %s136
      %139 = dma.hbm_to_vmem [thread:$0]  %s135, 48, %s137, [#allocation16]
    $region49: #{tpu_custom_call.1} parent=1 // pred_fallthru
      _
    // Predicated region
    $region50: #{tpu_custom_call.1} parent=1 // pred_check
      _
    $region51: #{tpu_custom_call.1} parent=1 // pred_check_branch
      %141 = sbr.rel (0) target = $region53
    $region52: #{tpu_custom_call.1} parent=1 // pred_region
      %143 = vsyncadd [#allocation19], 0
      %s145 = sshll.u32 %s12, 4
      %s146 = int_to_ptr.hbm [resolvable:$true] %s145
      %s147 = sshll.u32 [#allocation18], 4
      %s148 = int_to_ptr.vmem [resolvable:$true] %s147
      %150 = dma.hbm_to_vmem [thread:$0]  %s146, 48, %s148, [#allocation19]
    $region53: #{tpu_custom_call.1} parent=1 // pred_fallthru
      _
    // Predicated region
    $region54: #{tpu_custom_call.1} parent=1 // pred_check
      _
    $region55: #{tpu_custom_call.1} parent=1 // pred_check_branch
      %152 = sbr.rel (0) target = $region57
    $region56: #{tpu_custom_call.1} parent=1 // pred_region
      _
    $region57: #{tpu_custom_call.1} parent=1 // pred_fallthru
      _
    // Predicated region
    $region58: #{tpu_custom_call.1} parent=1 // pred_check
      _
    $region59: #{tpu_custom_call.1} parent=1 // pred_check_branch
      %154 = sbr.rel (0) target = $region61
    $region60: #{tpu_custom_call.1} parent=1 // pred_region
      _
    $region61: #{tpu_custom_call.1} parent=1 // pred_fallthru
      _
    // Predicated region
    $region62: #{tpu_custom_call.1} parent=1 // pred_check
      _
    $region63: #{tpu_custom_call.1} parent=1 // pred_check_branch
      %156 = sbr.rel (0) target = $region65
    $region64: #{tpu_custom_call.1} parent=1 // pred_region
      %158 = dma.done [#allocation4], 128
    $region65: #{tpu_custom_call.1} parent=1 // pred_fallthru
      _
    // Predicated region
    $region66: #{tpu_custom_call.1} parent=1 // pred_check
      _
    $region67: #{tpu_custom_call.1} parent=1 // pred_check_branch
      %160 = sbr.rel (0) target = $region69
    $region68: #{tpu_custom_call.1} parent=1 // pred_region
      %162 = dma.done [#allocation7], 1280
    $region69: #{tpu_custom_call.1} parent=1 // pred_fallthru
      _
    // Predicated region
    $region70: #{tpu_custom_call.1} parent=1 // pred_check
      _
    $region71: #{tpu_custom_call.1} parent=1 // pred_check_branch
      %164 = sbr.rel (0) target = $region73
    $region72: #{tpu_custom_call.1} parent=1 // pred_region
      %166 = dma.done [#allocation7], 64
    $region73: #{tpu_custom_call.1} parent=1 // pred_fallthru
      _
    // Predicated region
    $region74: #{tpu_custom_call.1} parent=1 // pred_check
      _
    $region75: #{tpu_custom_call.1} parent=1 // pred_check_branch
      %168 = sbr.rel (0) target = $region77
    $region76: #{tpu_custom_call.1} parent=1 // pred_region
      %170 = dma.done [#allocation10], 64
    $region77: #{tpu_custom_call.1} parent=1 // pred_fallthru
      _
    // Predicated region
    $region78: #{tpu_custom_call.1} parent=1 // pred_check
      _
    $region79: #{tpu_custom_call.1} parent=1 // pred_check_branch
      %172 = sbr.rel (0) target = $region81
    $region80: #{tpu_custom_call.1} parent=1 // pred_region
      %174 = dma.done [#allocation10], 16384
    $region81: #{tpu_custom_call.1} parent=1 // pred_fallthru
      _
    // Predicated region
    $region82: #{tpu_custom_call.1} parent=1 // pred_check
      _
    $region83: #{tpu_custom_call.1} parent=1 // pred_check_branch
      %176 = sbr.rel (0) target = $region85
    $region84: #{tpu_custom_call.1} parent=1 // pred_region
      %178 = dma.done [#allocation13], 64
    $region85: #{tpu_custom_call.1} parent=1 // pred_fallthru
      _
    // Predicated region
    $region86: #{tpu_custom_call.1} parent=1 // pred_check
      _
    $region87: #{tpu_custom_call.1} parent=1 // pred_check_branch
      %180 = sbr.rel (0) target = $region89
    $region88: #{tpu_custom_call.1} parent=1 // pred_region
      %182 = dma.done [#allocation13], 64
    $region89: #{tpu_custom_call.1} parent=1 // pred_fallthru
      _
    // Predicated region
    $region90: #{tpu_custom_call.1} parent=1 // pred_check
      _
    $region91: #{tpu_custom_call.1} parent=1 // pred_check_branch
      %184 = sbr.rel (0) target = $region93
    $region92: #{tpu_custom_call.1} parent=1 // pred_region
      %186 = dma.done [#allocation16], 12288
    $region93: #{tpu_custom_call.1} parent=1 // pred_fallthru
      _
    // Predicated region
    $region94: #{tpu_custom_call.1} parent=1 // pred_check
      _
    $region95: #{tpu_custom_call.1} parent=1 // pred_check_branch
      %188 = sbr.rel (0) target = $region97
    $region96: #{tpu_custom_call.1} parent=1 // pred_region
      %190 = dma.done [#allocation16], 48
    $region97: #{tpu_custom_call.1} parent=1 // pred_fallthru
      _
    // Predicated region
    $region98: #{tpu_custom_call.1} parent=1 // pred_check
      _
    $region99: #{tpu_custom_call.1} parent=1 // pred_check_branch
      %192 = sbr.rel (0) target = $region101
    $region100: #{tpu_custom_call.1} parent=1 // pred_region
      %194 = dma.done [#allocation19], 48
    $region101: #{tpu_custom_call.1} parent=1 // pred_fallthru
      _
    %v196 = vld [vmem:[#allocation3] sm:$0xff]
    %v197 = vpack.c.bf16 %v196, %v196
    %v198 = vld [vmem:[#allocation6] sm:$0xff]
    %v199 = vld [vmem:[#allocation6 + $0x8] sm:$0xff]
    %v200 = vld [vmem:[#allocation6 + $0x10] sm:$0xff]
    %v201 = vld [vmem:[#allocation6 + $0x18] sm:$0xff]
    %v202 = vld [vmem:[#allocation6 + $0x20] sm:$0xff]
    %v203 = vld [vmem:[#allocation6 + $0x28] sm:$0xff]
    %v204 = vld [vmem:[#allocation6 + $0x30] sm:$0xff]
    %v205 = vld [vmem:[#allocation6 + $0x38] sm:$0xff]
    %v206 = vld [vmem:[#allocation6 + $0x40] sm:$0xff]
    %v207 = vld [vmem:[#allocation6 + $0x48] sm:$0xff]
    %v208 = vld [vmem:[#allocation8] sm:$0xf]
    %v210 = vperm.slane %v208, 0
    %v211 = vperm.slane %v208, 1
    %v212 = vperm.slane %v208, 2
    %v213 = vperm.slane %v208, 3
    %v228 = vunpack.c.l.b16 %v198
    %v229 = vunpack.c.h.b16 %v198
    %v230 = vunpack.c.l.b16 %v199
    %v231 = vunpack.c.h.b16 %v199
    %v232 = vunpack.c.l.b16 %v200
    %v233 = vunpack.c.h.b16 %v200
    %v234 = vunpack.c.l.b16 %v201
    %v235 = vunpack.c.h.b16 %v201
    %v236 = vunpack.c.l.b16 %v202
    %v237 = vunpack.c.h.b16 %v202
    %v238 = vunpack.c.l.b16 %v203
    %v239 = vunpack.c.h.b16 %v203
    %v240 = vunpack.c.l.b16 %v204
    %v241 = vunpack.c.h.b16 %v204
    %v242 = vunpack.c.l.b16 %v205
    %v243 = vunpack.c.h.b16 %v205
    %v244 = vunpack.c.l.b16 %v206
    %v245 = vunpack.c.h.b16 %v206
    %v246 = vunpack.c.l.b16 %v207
    %v247 = vunpack.c.h.b16 %v207
    %v248 = vpack.c.b16 %v232, %v228
    %v249 = vpack.c.b16 %v233, %v229
    %v250 = vpack.c.b16 %v234, %v230
    %v251 = vpack.c.b16 %v235, %v231
    %v252 = vpack.c.b16 %v240, %v236
    %v253 = vpack.c.b16 %v241, %v237
    %v254 = vpack.c.b16 %v242, %v238
    %v255 = vpack.c.b16 %v243, %v239
    %v256 = vpack.c.b16 %v244, %v244
    %v257 = vpack.c.b16 %v245, %v245
    %v258 = vpack.c.b16 %v246, %v246
    %v259 = vpack.c.b16 %v247, %v247
    %vm268 = vcmask 326656
    %v270 = vsel %vm268, %v197, 0
    %vm272 = vcmask 1043456
    %v274 = vsel %vm272, %v256, 0
    %v277 = vsel %vm272, %v257, 0
    %v280 = vsel %vm272, %v258, 0
    %v283 = vsel %vm272, %v259, 0
    %285 = vmatpush.bf16.msra.mxu0 0
    %286 = vmatpush.bf16.msra.mxu0 0
    %287 = vmatpush.bf16.msra.mxu0 0
    %288 = vmatpush.bf16.msra.mxu0 0
    %289 = vmatpush.bf16.msra.mxu0 0
    %290 = vmatpush.bf16.msra.mxu0 %v274
    %291 = vmatpush.bf16.msra.mxu0 %v252
    %292 = vmatpush.bf16.msra.mxu0 %v248
    %293 = vmatmul.bf16.gmra.mxu0 %v270
    %v294 = vpop.f32.mrf.mxu0
    %v295 = vadd.f32 %v210, %v294
    %v296 = vpop.f32.mrf.mxu0
    %297 = vdwg.mxu0
    %298 = vmatpush.bf16.msra.mxu0 0
    %299 = vmatpush.bf16.msra.mxu0 0
    %300 = vmatpush.bf16.msra.mxu0 0
    %301 = vmatpush.bf16.msra.mxu0 0
    %302 = vmatpush.bf16.msra.mxu0 0
    %303 = vmatpush.bf16.msra.mxu0 %v277
    %304 = vmatpush.bf16.msra.mxu0 %v253
    %305 = vmatpush.bf16.msra.mxu0 %v249
    %306 = vmatmul.bf16.gmra.mxu0 %v270
    %v307 = vpop.f32.mrf.mxu0
    %v308 = vadd.f32 %v211, %v307
    %v309 = vpop.f32.mrf.mxu0
    %310 = vdwg.mxu0
    %311 = vmatpush.bf16.msra.mxu0 0
    %312 = vmatpush.bf16.msra.mxu0 0
    %313 = vmatpush.bf16.msra.mxu0 0
    %314 = vmatpush.bf16.msra.mxu0 0
    %315 = vmatpush.bf16.msra.mxu0 0
    %316 = vmatpush.bf16.msra.mxu0 %v280
    %317 = vmatpush.bf16.msra.mxu0 %v254
    %318 = vmatpush.bf16.msra.mxu0 %v250
    %319 = vmatmul.bf16.gmra.mxu0 %v270
    %v320 = vpop.f32.mrf.mxu0
    %v321 = vadd.f32 %v212, %v320
    %v322 = vpop.f32.mrf.mxu0
    %323 = vdwg.mxu0
    %324 = vmatpush.bf16.msra.mxu0 0
    %325 = vmatpush.bf16.msra.mxu0 0
    %326 = vmatpush.bf16.msra.mxu0 0
    %327 = vmatpush.bf16.msra.mxu0 0
    %328 = vmatpush.bf16.msra.mxu0 0
    %329 = vmatpush.bf16.msra.mxu0 %v283
    %330 = vmatpush.bf16.msra.mxu0 %v255
    %331 = vmatpush.bf16.msra.mxu0 %v251
    %332 = vmatmul.bf16.gmra.mxu0 %v270
    %v333 = vpop.f32.mrf.mxu0
    %v334 = vadd.f32 %v213, %v333
    %v335 = vpop.f32.mrf.mxu0
    %336 = vdwg.mxu0
    %v337 = vmax.f32 %v295, 0.0
    %v338 = vmax.f32 %v308, 0.0
    %v339 = vmax.f32 %v321, 0.0
    %v340 = vmax.f32 %v334, 0.0
    %v341 = vld [vmem:[%s3] sm:$0xf]
    %v342 = vld [vmem:[#allocation9] sm:$0xf]
    %v343 = vadd.f32 %v337, %v338
    %v344 = vadd.f32 %v343, %v339
    %v345 = vadd.f32 %v344, %v340
    %346 = vadd.xlane.f32.xlu0 %v345
    %v347 = vpop.xlane.xlu0 %346
    %v348 = vmul.f32 %v347, 0.0025
    %v349 = vmul.f32 %v337, %v337
    %v350 = vmul.f32 %v338, %v338
    %v351 = vmul.f32 %v339, %v339
    %v352 = vmul.f32 %v340, %v340
    %v353 = vadd.f32 %v349, %v350
    %v354 = vadd.f32 %v353, %v351
    %v355 = vadd.f32 %v354, %v352
    %356 = vadd.xlane.f32.xlu0 %v355
    %v357 = vpop.xlane.xlu0 %356
    %v358 = vmul.f32 %v357, 0.0025
    %v359 = vmul.f32 %v348, %v348
    %v360 = vsub.f32 %v358, %v359
    %v361 = vadd.f32 %v360, 1e-05
    %v362 = vrsqrt.pop %v361
    %v363 = vmul.f32 %v362, %v361
    %v364 = vmul.f32 %v363, %v362
    %v365 = vmul.f32 0.5, %v364
    %v366 = vsub.f32 1.5, %v365
    %v367 = vmul.f32 %v362, %v366
    %vm368 = vweird.f32 %v361
    %vm369 = vweird.f32 %v362
    %vm370 = vmor %vm368, %vm369
    %v371 = vsel %vm370, %v362, %v367
    %v372 = vsub.f32 %v337, %v348
    %v373 = vsub.f32 %v338, %v348
    %v374 = vsub.f32 %v339, %v348
    %v375 = vsub.f32 %v340, %v348
    %v376 = vmul.f32 %v372, %v371
    %v377 = vmul.f32 %v373, %v371
    %v378 = vmul.f32 %v374, %v371
    %v379 = vmul.f32 %v375, %v371
    %v381 = vperm.slane %v341, 0
    %v382 = vperm.slane %v341, 1
    %v383 = vperm.slane %v341, 2
    %v384 = vperm.slane %v341, 3
    %v389 = vmul.f32 %v376, %v381
    %v390 = vmul.f32 %v377, %v382
    %v391 = vmul.f32 %v378, %v383
    %v392 = vmul.f32 %v379, %v384
    %v394 = vperm.slane %v342, 0
    %v395 = vperm.slane %v342, 1
    %v396 = vperm.slane %v342, 2
    %v397 = vperm.slane %v342, 3
    %v402 = vadd.f32 %v389, %v394
    %v403 = vadd.f32 %v390, %v395
    %v404 = vadd.f32 %v391, %v396
    %v405 = vadd.f32 %v392, %v397
    %v406 = vpack.c.bf16 %v402, %v402
    %v407 = vpack.c.bf16 %v403, %v403
    %v408 = vpack.c.bf16 %v404, %v404
    %v409 = vpack.c.bf16 %v405, %v405
    %v410 = vld [vmem:[#allocation11] sm:$0xff]
    %v411 = vld [vmem:[#allocation11 + $0x8] sm:$0xff]
    %v412 = vld [vmem:[#allocation11 + $0x10] sm:$0xff]
    %v413 = vld [vmem:[#allocation11 + $0x18] sm:$0xff]
    %v414 = vld [vmem:[#allocation11 + $0x20] sm:$0xff]
    %v415 = vld [vmem:[#allocation11 + $0x28] sm:$0xff]
    %v416 = vld [vmem:[#allocation11 + $0x30] sm:$0xff]
    %v417 = vld [vmem:[#allocation11 + $0x38] sm:$0xff]
    %v418 = vld [vmem:[#allocation11 + $0x40] sm:$0xff]
    %v419 = vld [vmem:[#allocation11 + $0x48] sm:$0xff]
    %v420 = vld [vmem:[#allocation11 + $0x50] sm:$0xff]
    %v421 = vld [vmem:[#allocation11 + $0x58] sm:$0xff]
    %v422 = vld [vmem:[#allocation11 + $0x60] sm:$0xff]
    %v423 = vld [vmem:[#allocation11 + $0x68] sm:$0xff]
    %v424 = vld [vmem:[#allocation11 + $0x70] sm:$0xff]
    %v425 = vld [vmem:[#allocation11 + $0x78] sm:$0xff]
    %v426 = vld [vmem:[#allocation11 + $0x80] sm:$0xff]
    %v427 = vld [vmem:[#allocation11 + $0x88] sm:$0xff]
    %v428 = vld [vmem:[#allocation11 + $0x90] sm:$0xff]
    %v429 = vld [vmem:[#allocation11 + $0x98] sm:$0xff]
    %v430 = vld [vmem:[#allocation11 + $0xa0] sm:$0xff]
    %v431 = vld [vmem:[#allocation11 + $0xa8] sm:$0xff]
    %v432 = vld [vmem:[#allocation11 + $0xb0] sm:$0xff]
    %v433 = vld [vmem:[#allocation11 + $0xb8] sm:$0xff]
    %v434 = vld [vmem:[#allocation11 + $0xc0] sm:$0xff]
    %v435 = vld [vmem:[#allocation11 + $0xc8] sm:$0xff]
    %v436 = vld [vmem:[#allocation11 + $0xd0] sm:$0xff]
    %v437 = vld [vmem:[#allocation11 + $0xd8] sm:$0xff]
    %v438 = vld [vmem:[#allocation11 + $0xe0] sm:$0xff]
    %v439 = vld [vmem:[#allocation11 + $0xe8] sm:$0xff]
    %v440 = vld [vmem:[#allocation11 + $0xf0] sm:$0xff]
    %v441 = vld [vmem:[#allocation11 + $0xf8] sm:$0xff]
    %v442 = vld [vmem:[#allocation11 + $0x100] sm:$0xff]
    %v443 = vld [vmem:[#allocation11 + $0x108] sm:$0xff]
    %v444 = vld [vmem:[#allocation11 + $0x110] sm:$0xff]
    %v445 = vld [vmem:[#allocation11 + $0x118] sm:$0xff]
    %v446 = vld [vmem:[#allocation11 + $0x120] sm:$0xff]
    %v447 = vld [vmem:[#allocation11 + $0x128] sm:$0xff]
    %v448 = vld [vmem:[#allocation11 + $0x130] sm:$0xff]
    %v449 = vld [vmem:[#allocation11 + $0x138] sm:$0xff]
    %v450 = vld [vmem:[#allocation11 + $0x140] sm:$0xff]
    %v451 = vld [vmem:[#allocation11 + $0x148] sm:$0xff]
    %v452 = vld [vmem:[#allocation11 + $0x150] sm:$0xff]
    %v453 = vld [vmem:[#allocation11 + $0x158] sm:$0xff]
    %v454 = vld [vmem:[#allocation11 + $0x160] sm:$0xff]
    %v455 = vld [vmem:[#allocation11 + $0x168] sm:$0xff]
    %v456 = vld [vmem:[#allocation11 + $0x170] sm:$0xff]
    %v457 = vld [vmem:[#allocation11 + $0x178] sm:$0xff]
    %v458 = vld [vmem:[#allocation11 + $0x180] sm:$0xff]
    %v459 = vld [vmem:[#allocation11 + $0x188] sm:$0xff]
    %v460 = vld [vmem:[#allocation11 + $0x190] sm:$0xff]
    %v461 = vld [vmem:[#allocation11 + $0x198] sm:$0xff]
    %v462 = vld [vmem:[#allocation11 + $0x1a0] sm:$0xff]
    %v463 = vld [vmem:[#allocation11 + $0x1a8] sm:$0xff]
    %v464 = vld [vmem:[#allocation11 + $0x1b0] sm:$0xff]
    %v465 = vld [vmem:[#allocation11 + $0x1b8] sm:$0xff]
    %v466 = vld [vmem:[#allocation11 + $0x1c0] sm:$0xff]
    %v467 = vld [vmem:[#allocation11 + $0x1c8] sm:$0xff]
    %v468 = vld [vmem:[#allocation11 + $0x1d0] sm:$0xff]
    %v469 = vld [vmem:[#allocation11 + $0x1d8] sm:$0xff]
    %v470 = vld [vmem:[#allocation11 + $0x1e0] sm:$0xff]
    %v471 = vld [vmem:[#allocation11 + $0x1e8] sm:$0xff]
    %v472 = vld [vmem:[#allocation11 + $0x1f0] sm:$0xff]
    %v473 = vld [vmem:[#allocation11 + $0x1f8] sm:$0xff]
    %v474 = vld [vmem:[#allocation11 + $0x200] sm:$0xff]
    %v475 = vld [vmem:[#allocation11 + $0x208] sm:$0xff]
    %v476 = vld [vmem:[#allocation11 + $0x210] sm:$0xff]
    %v477 = vld [vmem:[#allocation11 + $0x218] sm:$0xff]
    %v478 = vld [vmem:[#allocation11 + $0x220] sm:$0xff]
    %v479 = vld [vmem:[#allocation11 + $0x228] sm:$0xff]
    %v480 = vld [vmem:[#allocation11 + $0x230] sm:$0xff]
    %v481 = vld [vmem:[#allocation11 + $0x238] sm:$0xff]
    %v482 = vld [vmem:[#allocation11 + $0x240] sm:$0xff]
    %v483 = vld [vmem:[#allocation11 + $0x248] sm:$0xff]
    %v484 = vld [vmem:[#allocation11 + $0x250] sm:$0xff]
    %v485 = vld [vmem:[#allocation11 + $0x258] sm:$0xff]
    %v486 = vld [vmem:[#allocation11 + $0x260] sm:$0xff]
    %v487 = vld [vmem:[#allocation11 + $0x268] sm:$0xff]
    %v488 = vld [vmem:[#allocation11 + $0x270] sm:$0xff]
    %v489 = vld [vmem:[#allocation11 + $0x278] sm:$0xff]
    %v490 = vld [vmem:[#allocation11 + $0x280] sm:$0xff]
    %v491 = vld [vmem:[#allocation11 + $0x288] sm:$0xff]
    %v492 = vld [vmem:[#allocation11 + $0x290] sm:$0xff]
    %v493 = vld [vmem:[#allocation11 + $0x298] sm:$0xff]
    %v494 = vld [vmem:[#allocation11 + $0x2a0] sm:$0xff]
    %v495 = vld [vmem:[#allocation11 + $0x2a8] sm:$0xff]
    %v496 = vld [vmem:[#allocation11 + $0x2b0] sm:$0xff]
    %v497 = vld [vmem:[#allocation11 + $0x2b8] sm:$0xff]
    %v498 = vld [vmem:[#allocation11 + $0x2c0] sm:$0xff]
    %v499 = vld [vmem:[#allocation11 + $0x2c8] sm:$0xff]
    %v500 = vld [vmem:[#allocation11 + $0x2d0] sm:$0xff]
    %v501 = vld [vmem:[#allocation11 + $0x2d8] sm:$0xff]
    %v502 = vld [vmem:[#allocation11 + $0x2e0] sm:$0xff]
    %v503 = vld [vmem:[#allocation11 + $0x2e8] sm:$0xff]
    %v504 = vld [vmem:[#allocation11 + $0x2f0] sm:$0xff]
    %v505 = vld [vmem:[#allocation11 + $0x2f8] sm:$0xff]
    %v506 = vld [vmem:[#allocation11 + $0x300] sm:$0xff]
    %v507 = vld [vmem:[#allocation11 + $0x308] sm:$0xff]
    %v508 = vld [vmem:[#allocation11 + $0x310] sm:$0xff]
    %v509 = vld [vmem:[#allocation11 + $0x318] sm:$0xff]
    %v510 = vld [vmem:[#allocation11 + $0x320] sm:$0xff]
    %v511 = vld [vmem:[#allocation11 + $0x328] sm:$0xff]
    %v512 = vld [vmem:[#allocation11 + $0x330] sm:$0xff]
    %v513 = vld [vmem:[#allocation11 + $0x338] sm:$0xff]
    %v514 = vld [vmem:[#allocation11 + $0x340] sm:$0xff]
    %v515 = vld [vmem:[#allocation11 + $0x348] sm:$0xff]
    %v516 = vld [vmem:[#allocation11 + $0x350] sm:$0xff]
    %v517 = vld [vmem:[#allocation11 + $0x358] sm:$0xff]
    %v518 = vld [vmem:[#allocation11 + $0x360] sm:$0xff]
    %v519 = vld [vmem:[#allocation11 + $0x368] sm:$0xff]
    %v520 = vld [vmem:[#allocation11 + $0x370] sm:$0xff]
    %v521 = vld [vmem:[#allocation11 + $0x378] sm:$0xff]
    %v522 = vld [vmem:[#allocation11 + $0x380] sm:$0xff]
    %v523 = vld [vmem:[#allocation11 + $0x388] sm:$0xff]
    %v524 = vld [vmem:[#allocation11 + $0x390] sm:$0xff]
    %v525 = vld [vmem:[#allocation11 + $0x398] sm:$0xff]
    %v526 = vld [vmem:[#allocation11 + $0x3a0] sm:$0xff]
    %v527 = vld [vmem:[#allocation11 + $0x3a8] sm:$0xff]
    %v528 = vld [vmem:[#allocation11 + $0x3b0] sm:$0xff]
    %v529 = vld [vmem:[#allocation11 + $0x3b8] sm:$0xff]
    %v530 = vld [vmem:[#allocation11 + $0x3c0] sm:$0xff]
    %v531 = vld [vmem:[#allocation11 + $0x3c8] sm:$0xff]
    %v532 = vld [vmem:[#allocation11 + $0x3d0] sm:$0xff]
    %v533 = vld [vmem:[#allocation11 + $0x3d8] sm:$0xff]
    %v534 = vld [vmem:[#allocation11 + $0x3e0] sm:$0xff]
    %v535 = vld [vmem:[#allocation11 + $0x3e8] sm:$0xff]
    %v536 = vld [vmem:[#allocation11 + $0x3f0] sm:$0xff]
    %v537 = vld [vmem:[#allocation11 + $0x3f8] sm:$0xff]
    %v538 = vld [vmem:[#allocation12] sm:$0xf]
    %v540 = vperm.slane %v538, 0
    %v541 = vperm.slane %v538, 1
    %v542 = vperm.slane %v538, 2
    %v543 = vperm.slane %v538, 3
    %v676 = vunpack.c.l.b16 %v410
    %v677 = vunpack.c.h.b16 %v410
    %v678 = vunpack.c.l.b16 %v411
    %v679 = vunpack.c.h.b16 %v411
    %v680 = vunpack.c.l.b16 %v412
    %v681 = vunpack.c.h.b16 %v412
    %v682 = vunpack.c.l.b16 %v413
    %v683 = vunpack.c.h.b16 %v413
    %v684 = vunpack.c.l.b16 %v414
    %v685 = vunpack.c.h.b16 %v414
    %v686 = vunpack.c.l.b16 %v415
    %v687 = vunpack.c.h.b16 %v415
    %v688 = vunpack.c.l.b16 %v416
    %v689 = vunpack.c.h.b16 %v416
    %v690 = vunpack.c.l.b16 %v417
    %v691 = vunpack.c.h.b16 %v417
    %v692 = vunpack.c.l.b16 %v418
    %v693 = vunpack.c.h.b16 %v418
    %v694 = vunpack.c.l.b16 %v419
    %v695 = vunpack.c.h.b16 %v419
    %v696 = vunpack.c.l.b16 %v420
    %v697 = vunpack.c.h.b16 %v420
    %v698 = vunpack.c.l.b16 %v421
    %v699 = vunpack.c.h.b16 %v421
    %v700 = vunpack.c.l.b16 %v422
    %v701 = vunpack.c.h.b16 %v422
    %v702 = vunpack.c.l.b16 %v423
    %v703 = vunpack.c.h.b16 %v423
    %v704 = vunpack.c.l.b16 %v424
    %v705 = vunpack.c.h.b16 %v424
    %v706 = vunpack.c.l.b16 %v425
    %v707 = vunpack.c.h.b16 %v425
    %v708 = vunpack.c.l.b16 %v426
    %v709 = vunpack.c.h.b16 %v426
    %v710 = vunpack.c.l.b16 %v427
    %v711 = vunpack.c.h.b16 %v427
    %v712 = vunpack.c.l.b16 %v428
    %v713 = vunpack.c.h.b16 %v428
    %v714 = vunpack.c.l.b16 %v429
    %v715 = vunpack.c.h.b16 %v429
    %v716 = vunpack.c.l.b16 %v430
    %v717 = vunpack.c.h.b16 %v430
    %v718 = vunpack.c.l.b16 %v431
    %v719 = vunpack.c.h.b16 %v431
    %v720 = vunpack.c.l.b16 %v432
    %v721 = vunpack.c.h.b16 %v432
    %v722 = vunpack.c.l.b16 %v433
    %v723 = vunpack.c.h.b16 %v433
    %v724 = vunpack.c.l.b16 %v434
    %v725 = vunpack.c.h.b16 %v434
    %v726 = vunpack.c.l.b16 %v435
    %v727 = vunpack.c.h.b16 %v435
    %v728 = vunpack.c.l.b16 %v436
    %v729 = vunpack.c.h.b16 %v436
    %v730 = vunpack.c.l.b16 %v437
    %v731 = vunpack.c.h.b16 %v437
    %v732 = vunpack.c.l.b16 %v438
    %v733 = vunpack.c.h.b16 %v438
    %v734 = vunpack.c.l.b16 %v439
    %v735 = vunpack.c.h.b16 %v439
    %v736 = vunpack.c.l.b16 %v440
    %v737 = vunpack.c.h.b16 %v440
    %v738 = vunpack.c.l.b16 %v441
    %v739 = vunpack.c.h.b16 %v441
    %v740 = vunpack.c.l.b16 %v442
    %v741 = vunpack.c.h.b16 %v442
    %v742 = vunpack.c.l.b16 %v443
    %v743 = vunpack.c.h.b16 %v443
    %v744 = vunpack.c.l.b16 %v444
    %v745 = vunpack.c.h.b16 %v444
    %v746 = vunpack.c.l.b16 %v445
    %v747 = vunpack.c.h.b16 %v445
    %v748 = vunpack.c.l.b16 %v446
    %v749 = vunpack.c.h.b16 %v446
    %v750 = vunpack.c.l.b16 %v447
    %v751 = vunpack.c.h.b16 %v447
    %v752 = vunpack.c.l.b16 %v448
    %v753 = vunpack.c.h.b16 %v448
    %v754 = vunpack.c.l.b16 %v449
    %v755 = vunpack.c.h.b16 %v449
    %v756 = vunpack.c.l.b16 %v450
    %v757 = vunpack.c.h.b16 %v450
    %v758 = vunpack.c.l.b16 %v451
    %v759 = vunpack.c.h.b16 %v451
    %v760 = vunpack.c.l.b16 %v452
    %v761 = vunpack.c.h.b16 %v452
    %v762 = vunpack.c.l.b16 %v453
    %v763 = vunpack.c.h.b16 %v453
    %v764 = vunpack.c.l.b16 %v454
    %v765 = vunpack.c.h.b16 %v454
    %v766 = vunpack.c.l.b16 %v455
    %v767 = vunpack.c.h.b16 %v455
    %v768 = vunpack.c.l.b16 %v456
    %v769 = vunpack.c.h.b16 %v456
    %v770 = vunpack.c.l.b16 %v457
    %v771 = vunpack.c.h.b16 %v457
    %v772 = vunpack.c.l.b16 %v458
    %v773 = vunpack.c.h.b16 %v458
    %v774 = vunpack.c.l.b16 %v459
    %v775 = vunpack.c.h.b16 %v459
    %v776 = vunpack.c.l.b16 %v460
    %v777 = vunpack.c.h.b16 %v460
    %v778 = vunpack.c.l.b16 %v461
    %v779 = vunpack.c.h.b16 %v461
    %v780 = vunpack.c.l.b16 %v462
    %v781 = vunpack.c.h.b16 %v462
    %v782 = vunpack.c.l.b16 %v463
    %v783 = vunpack.c.h.b16 %v463
    %v784 = vunpack.c.l.b16 %v464
    %v785 = vunpack.c.h.b16 %v464
    %v786 = vunpack.c.l.b16 %v465
    %v787 = vunpack.c.h.b16 %v465
    %v788 = vunpack.c.l.b16 %v466
    %v789 = vunpack.c.h.b16 %v466
    %v790 = vunpack.c.l.b16 %v467
    %v791 = vunpack.c.h.b16 %v467
    %v792 = vunpack.c.l.b16 %v468
    %v793 = vunpack.c.h.b16 %v468
    %v794 = vunpack.c.l.b16 %v469
    %v795 = vunpack.c.h.b16 %v469
    %v796 = vunpack.c.l.b16 %v470
    %v797 = vunpack.c.h.b16 %v470
    %v798 = vunpack.c.l.b16 %v471
    %v799 = vunpack.c.h.b16 %v471
    %v800 = vunpack.c.l.b16 %v472
    %v801 = vunpack.c.h.b16 %v472
    %v802 = vunpack.c.l.b16 %v473
    %v803 = vunpack.c.h.b16 %v473
    %v804 = vunpack.c.l.b16 %v474
    %v805 = vunpack.c.h.b16 %v474
    %v806 = vunpack.c.l.b16 %v475
    %v807 = vunpack.c.h.b16 %v475
    %v808 = vunpack.c.l.b16 %v476
    %v809 = vunpack.c.h.b16 %v476
    %v810 = vunpack.c.l.b16 %v477
    %v811 = vunpack.c.h.b16 %v477
    %v812 = vunpack.c.l.b16 %v478
    %v813 = vunpack.c.h.b16 %v478
    %v814 = vunpack.c.l.b16 %v479
    %v815 = vunpack.c.h.b16 %v479
    %v816 = vunpack.c.l.b16 %v480
    %v817 = vunpack.c.h.b16 %v480
    %v818 = vunpack.c.l.b16 %v481
    %v819 = vunpack.c.h.b16 %v481
    %v820 = vunpack.c.l.b16 %v482
    %v821 = vunpack.c.h.b16 %v482
    %v822 = vunpack.c.l.b16 %v483
    %v823 = vunpack.c.h.b16 %v483
    %v824 = vunpack.c.l.b16 %v484
    %v825 = vunpack.c.h.b16 %v484
    %v826 = vunpack.c.l.b16 %v485
    %v827 = vunpack.c.h.b16 %v485
    %v828 = vunpack.c.l.b16 %v486
    %v829 = vunpack.c.h.b16 %v486
    %v830 = vunpack.c.l.b16 %v487
    %v831 = vunpack.c.h.b16 %v487
    %v832 = vunpack.c.l.b16 %v488
    %v833 = vunpack.c.h.b16 %v488
    %v834 = vunpack.c.l.b16 %v489
    %v835 = vunpack.c.h.b16 %v489
    %v836 = vunpack.c.l.b16 %v490
    %v837 = vunpack.c.h.b16 %v490
    %v838 = vunpack.c.l.b16 %v491
    %v839 = vunpack.c.h.b16 %v491
    %v840 = vunpack.c.l.b16 %v492
    %v841 = vunpack.c.h.b16 %v492
    %v842 = vunpack.c.l.b16 %v493
    %v843 = vunpack.c.h.b16 %v493
    %v844 = vunpack.c.l.b16 %v494
    %v845 = vunpack.c.h.b16 %v494
    %v846 = vunpack.c.l.b16 %v495
    %v847 = vunpack.c.h.b16 %v495
    %v848 = vunpack.c.l.b16 %v496
    %v849 = vunpack.c.h.b16 %v496
    %v850 = vunpack.c.l.b16 %v497
    %v851 = vunpack.c.h.b16 %v497
    %v852 = vunpack.c.l.b16 %v498
    %v853 = vunpack.c.h.b16 %v498
    %v854 = vunpack.c.l.b16 %v499
    %v855 = vunpack.c.h.b16 %v499
    %v856 = vunpack.c.l.b16 %v500
    %v857 = vunpack.c.h.b16 %v500
    %v858 = vunpack.c.l.b16 %v501
    %v859 = vunpack.c.h.b16 %v501
    %v860 = vunpack.c.l.b16 %v502
    %v861 = vunpack.c.h.b16 %v502
    %v862 = vunpack.c.l.b16 %v503
    %v863 = vunpack.c.h.b16 %v503
    %v864 = vunpack.c.l.b16 %v504
    %v865 = vunpack.c.h.b16 %v504
    %v866 = vunpack.c.l.b16 %v505
    %v867 = vunpack.c.h.b16 %v505
    %v868 = vunpack.c.l.b16 %v506
    %v869 = vunpack.c.h.b16 %v506
    %v870 = vunpack.c.l.b16 %v507
    %v871 = vunpack.c.h.b16 %v507
    %v872 = vunpack.c.l.b16 %v508
    %v873 = vunpack.c.h.b16 %v508
    %v874 = vunpack.c.l.b16 %v509
    %v875 = vunpack.c.h.b16 %v509
    %v876 = vunpack.c.l.b16 %v510
    %v877 = vunpack.c.h.b16 %v510
    %v878 = vunpack.c.l.b16 %v511
    %v879 = vunpack.c.h.b16 %v511
    %v880 = vunpack.c.l.b16 %v512
    %v881 = vunpack.c.h.b16 %v512
    %v882 = vunpack.c.l.b16 %v513
    %v883 = vunpack.c.h.b16 %v513
    %v884 = vunpack.c.l.b16 %v514
    %v885 = vunpack.c.h.b16 %v514
    %v886 = vunpack.c.l.b16 %v515
    %v887 = vunpack.c.h.b16 %v515
    %v888 = vunpack.c.l.b16 %v516
    %v889 = vunpack.c.h.b16 %v516
    %v890 = vunpack.c.l.b16 %v517
    %v891 = vunpack.c.h.b16 %v517
    %v892 = vunpack.c.l.b16 %v518
    %v893 = vunpack.c.h.b16 %v518
    %v894 = vunpack.c.l.b16 %v519
    %v895 = vunpack.c.h.b16 %v519
    %v896 = vunpack.c.l.b16 %v520
    %v897 = vunpack.c.h.b16 %v520
    %v898 = vunpack.c.l.b16 %v521
    %v899 = vunpack.c.h.b16 %v521
    %v900 = vunpack.c.l.b16 %v522
    %v901 = vunpack.c.h.b16 %v522
    %v902 = vunpack.c.l.b16 %v523
    %v903 = vunpack.c.h.b16 %v523
    %v904 = vunpack.c.l.b16 %v524
    %v905 = vunpack.c.h.b16 %v524
    %v906 = vunpack.c.l.b16 %v525
    %v907 = vunpack.c.h.b16 %v525
    %v908 = vunpack.c.l.b16 %v526
    %v909 = vunpack.c.h.b16 %v526
    %v910 = vunpack.c.l.b16 %v527
    %v911 = vunpack.c.h.b16 %v527
    %v912 = vunpack.c.l.b16 %v528
    %v913 = vunpack.c.h.b16 %v528
    %v914 = vunpack.c.l.b16 %v529
    %v915 = vunpack.c.h.b16 %v529
    %v916 = vunpack.c.l.b16 %v530
    %v917 = vunpack.c.h.b16 %v530
    %v918 = vunpack.c.l.b16 %v531
    %v919 = vunpack.c.h.b16 %v531
    %v920 = vunpack.c.l.b16 %v532
    %v921 = vunpack.c.h.b16 %v532
    %v922 = vunpack.c.l.b16 %v533
    %v923 = vunpack.c.h.b16 %v533
    %v924 = vunpack.c.l.b16 %v534
    %v925 = vunpack.c.h.b16 %v534
    %v926 = vunpack.c.l.b16 %v535
    %v927 = vunpack.c.h.b16 %v535
    %v928 = vunpack.c.l.b16 %v536
    %v929 = vunpack.c.h.b16 %v536
    %v930 = vunpack.c.l.b16 %v537
    %v931 = vunpack.c.h.b16 %v537
    %v932 = vpack.c.b16 %v680, %v676
    %v933 = vpack.c.b16 %v681, %v677
    %v934 = vpack.c.b16 %v682, %v678
    %v935 = vpack.c.b16 %v683, %v679
    %v936 = vpack.c.b16 %v688, %v684
    %v937 = vpack.c.b16 %v689, %v685
    %v938 = vpack.c.b16 %v690, %v686
    %v939 = vpack.c.b16 %v691, %v687
    %v940 = vpack.c.b16 %v696, %v692
    %v941 = vpack.c.b16 %v697, %v693
    %v942 = vpack.c.b16 %v698, %v694
    %v943 = vpack.c.b16 %v699, %v695
    %v944 = vpack.c.b16 %v704, %v700
    %v945 = vpack.c.b16 %v705, %v701
    %v946 = vpack.c.b16 %v706, %v702
    %v947 = vpack.c.b16 %v707, %v703
    %v948 = vpack.c.b16 %v712, %v708
    %v949 = vpack.c.b16 %v713, %v709
    %v950 = vpack.c.b16 %v714, %v710
    %v951 = vpack.c.b16 %v715, %v711
    %v952 = vpack.c.b16 %v720, %v716
    %v953 = vpack.c.b16 %v721, %v717
    %v954 = vpack.c.b16 %v722, %v718
    %v955 = vpack.c.b16 %v723, %v719
    %v956 = vpack.c.b16 %v728, %v724
    %v957 = vpack.c.b16 %v729, %v725
    %v958 = vpack.c.b16 %v730, %v726
    %v959 = vpack.c.b16 %v731, %v727
    %v960 = vpack.c.b16 %v736, %v732
    %v961 = vpack.c.b16 %v737, %v733
    %v962 = vpack.c.b16 %v738, %v734
    %v963 = vpack.c.b16 %v739, %v735
    %v964 = vpack.c.b16 %v744, %v740
    %v965 = vpack.c.b16 %v745, %v741
    %v966 = vpack.c.b16 %v746, %v742
    %v967 = vpack.c.b16 %v747, %v743
    %v968 = vpack.c.b16 %v752, %v748
    %v969 = vpack.c.b16 %v753, %v749
    %v970 = vpack.c.b16 %v754, %v750
    %v971 = vpack.c.b16 %v755, %v751
    %v972 = vpack.c.b16 %v760, %v756
    %v973 = vpack.c.b16 %v761, %v757
    %v974 = vpack.c.b16 %v762, %v758
    %v975 = vpack.c.b16 %v763, %v759
    %v976 = vpack.c.b16 %v768, %v764
    %v977 = vpack.c.b16 %v769, %v765
    %v978 = vpack.c.b16 %v770, %v766
    %v979 = vpack.c.b16 %v771, %v767
    %v980 = vpack.c.b16 %v776, %v772
    %v981 = vpack.c.b16 %v777, %v773
    %v982 = vpack.c.b16 %v778, %v774
    %v983 = vpack.c.b16 %v779, %v775
    %v984 = vpack.c.b16 %v784, %v780
    %v985 = vpack.c.b16 %v785, %v781
    %v986 = vpack.c.b16 %v786, %v782
    %v987 = vpack.c.b16 %v787, %v783
    %v988 = vpack.c.b16 %v792, %v788
    %v989 = vpack.c.b16 %v793, %v789
    %v990 = vpack.c.b16 %v794, %v790
    %v991 = vpack.c.b16 %v795, %v791
    %v992 = vpack.c.b16 %v800, %v796
    %v993 = vpack.c.b16 %v801, %v797
    %v994 = vpack.c.b16 %v802, %v798
    %v995 = vpack.c.b16 %v803, %v799
    %v996 = vpack.c.b16 %v808, %v804
    %v997 = vpack.c.b16 %v809, %v805
    %v998 = vpack.c.b16 %v810, %v806
    %v999 = vpack.c.b16 %v811, %v807
    %v1000 = vpack.c.b16 %v816, %v812
    %v1001 = vpack.c.b16 %v817, %v813
    %v1002 = vpack.c.b16 %v818, %v814
    %v1003 = vpack.c.b16 %v819, %v815
    %v1004 = vpack.c.b16 %v824, %v820
    %v1005 = vpack.c.b16 %v825, %v821
    %v1006 = vpack.c.b16 %v826, %v822
    %v1007 = vpack.c.b16 %v827, %v823
    %v1008 = vpack.c.b16 %v832, %v828
    %v1009 = vpack.c.b16 %v833, %v829
    %v1010 = vpack.c.b16 %v834, %v830
    %v1011 = vpack.c.b16 %v835, %v831
    %v1012 = vpack.c.b16 %v840, %v836
    %v1013 = vpack.c.b16 %v841, %v837
    %v1014 = vpack.c.b16 %v842, %v838
    %v1015 = vpack.c.b16 %v843, %v839
    %v1016 = vpack.c.b16 %v848, %v844
    %v1017 = vpack.c.b16 %v849, %v845
    %v1018 = vpack.c.b16 %v850, %v846
    %v1019 = vpack.c.b16 %v851, %v847
    %v1020 = vpack.c.b16 %v856, %v852
    %v1021 = vpack.c.b16 %v857, %v853
    %v1022 = vpack.c.b16 %v858, %v854
    %v1023 = vpack.c.b16 %v859, %v855
    %v1024 = vpack.c.b16 %v864, %v860
    %v1025 = vpack.c.b16 %v865, %v861
    %v1026 = vpack.c.b16 %v866, %v862
    %v1027 = vpack.c.b16 %v867, %v863
    %v1028 = vpack.c.b16 %v872, %v868
    %v1029 = vpack.c.b16 %v873, %v869
    %v1030 = vpack.c.b16 %v874, %v870
    %v1031 = vpack.c.b16 %v875, %v871
    %v1032 = vpack.c.b16 %v880, %v876
    %v1033 = vpack.c.b16 %v881, %v877
    %v1034 = vpack.c.b16 %v882, %v878
    %v1035 = vpack.c.b16 %v883, %v879
    %v1036 = vpack.c.b16 %v888, %v884
    %v1037 = vpack.c.b16 %v889, %v885
    %v1038 = vpack.c.b16 %v890, %v886
    %v1039 = vpack.c.b16 %v891, %v887
    %v1040 = vpack.c.b16 %v896, %v892
    %v1041 = vpack.c.b16 %v897, %v893
    %v1042 = vpack.c.b16 %v898, %v894
    %v1043 = vpack.c.b16 %v899, %v895
    %v1044 = vpack.c.b16 %v904, %v900
    %v1045 = vpack.c.b16 %v905, %v901
    %v1046 = vpack.c.b16 %v906, %v902
    %v1047 = vpack.c.b16 %v907, %v903
    %v1048 = vpack.c.b16 %v912, %v908
    %v1049 = vpack.c.b16 %v913, %v909
    %v1050 = vpack.c.b16 %v914, %v910
    %v1051 = vpack.c.b16 %v915, %v911
    %v1052 = vpack.c.b16 %v920, %v916
    %v1053 = vpack.c.b16 %v921, %v917
    %v1054 = vpack.c.b16 %v922, %v918
    %v1055 = vpack.c.b16 %v923, %v919
    %v1056 = vpack.c.b16 %v928, %v924
    %v1057 = vpack.c.b16 %v929, %v925
    %v1058 = vpack.c.b16 %v930, %v926
    %v1059 = vpack.c.b16 %v931, %v927
    %1188 = vmatpush.bf16.msra.mxu0 %v960
    %1189 = vmatpush.bf16.msra.mxu0 %v956
    %1190 = vmatpush.bf16.msra.mxu0 %v952
    %1191 = vmatpush.bf16.msra.mxu0 %v948
    %1192 = vmatpush.bf16.msra.mxu0 %v944
    %1193 = vmatpush.bf16.msra.mxu0 %v940
    %1194 = vmatpush.bf16.msra.mxu0 %v936
    %1195 = vmatpush.bf16.msra.mxu0 %v932
    %1196 = vmatmul.bf16.gmra.mxu0 %v406
    %v1197 = vpop.f32.mrf.mxu0
    %v1198 = vadd.f32 %v540, %v1197
    %v1199 = vpop.f32.mrf.mxu0
    %1200 = vdwg.mxu0
    %1201 = vmatpush.bf16.msra.mxu0 %v992
    %1202 = vmatpush.bf16.msra.mxu0 %v988
    %1203 = vmatpush.bf16.msra.mxu0 %v984
    %1204 = vmatpush.bf16.msra.mxu0 %v980
    %1205 = vmatpush.bf16.msra.mxu0 %v976
    %1206 = vmatpush.bf16.msra.mxu0 %v972
    %1207 = vmatpush.bf16.msra.mxu0 %v968
    %1208 = vmatpush.bf16.msra.mxu0 %v964
    %1209 = vmatmul.bf16.gmra.mxu0 %v407
    %v1210 = vpop.f32.mrf.mxu0
    %v1211 = vadd.f32 %v1198, %v1210
    %v1212 = vpop.f32.mrf.mxu0
    %1213 = vdwg.mxu0
    %1214 = vmatpush.bf16.msra.mxu0 %v1024
    %1215 = vmatpush.bf16.msra.mxu0 %v1020
    %1216 = vmatpush.bf16.msra.mxu0 %v1016
    %1217 = vmatpush.bf16.msra.mxu0 %v1012
    %1218 = vmatpush.bf16.msra.mxu0 %v1008
    %1219 = vmatpush.bf16.msra.mxu0 %v1004
    %1220 = vmatpush.bf16.msra.mxu0 %v1000
    %1221 = vmatpush.bf16.msra.mxu0 %v996
    %1222 = vmatmul.bf16.gmra.mxu0 %v408
    %v1223 = vpop.f32.mrf.mxu0
    %v1224 = vadd.f32 %v1211, %v1223
    %v1225 = vpop.f32.mrf.mxu0
    %1226 = vdwg.mxu0
    %1227 = vmatpush.bf16.msra.mxu0 %v1056
    %1228 = vmatpush.bf16.msra.mxu0 %v1052
    %1229 = vmatpush.bf16.msra.mxu0 %v1048
    %1230 = vmatpush.bf16.msra.mxu0 %v1044
    %1231 = vmatpush.bf16.msra.mxu0 %v1040
    %1232 = vmatpush.bf16.msra.mxu0 %v1036
    %1233 = vmatpush.bf16.msra.mxu0 %v1032
    %1234 = vmatpush.bf16.msra.mxu0 %v1028
    %1235 = vmatmul.bf16.gmra.mxu0 %v409
    %v1236 = vpop.f32.mrf.mxu0
    %v1237 = vadd.f32 %v1224, %v1236
    %v1238 = vpop.f32.mrf.mxu0
    %1239 = vdwg.mxu0
    %1240 = vmatpush.bf16.msra.mxu0 %v961
    %1241 = vmatpush.bf16.msra.mxu0 %v957
    %1242 = vmatpush.bf16.msra.mxu0 %v953
    %1243 = vmatpush.bf16.msra.mxu0 %v949
    %1244 = vmatpush.bf16.msra.mxu0 %v945
    %1245 = vmatpush.bf16.msra.mxu0 %v941
    %1246 = vmatpush.bf16.msra.mxu0 %v937
    %1247 = vmatpush.bf16.msra.mxu0 %v933
    %1248 = vmatmul.bf16.gmra.mxu0 %v406
    %v1249 = vpop.f32.mrf.mxu0
    %v1250 = vadd.f32 %v541, %v1249
    %v1251 = vpop.f32.mrf.mxu0
    %1252 = vdwg.mxu0
    %1253 = vmatpush.bf16.msra.mxu0 %v993
    %1254 = vmatpush.bf16.msra.mxu0 %v989
    %1255 = vmatpush.bf16.msra.mxu0 %v985
    %1256 = vmatpush.bf16.msra.mxu0 %v981
    %1257 = vmatpush.bf16.msra.mxu0 %v977
    %1258 = vmatpush.bf16.msra.mxu0 %v973
    %1259 = vmatpush.bf16.msra.mxu0 %v969
    %1260 = vmatpush.bf16.msra.mxu0 %v965
    %1261 = vmatmul.bf16.gmra.mxu0 %v407
    %v1262 = vpop.f32.mrf.mxu0
    %v1263 = vadd.f32 %v1250, %v1262
    %v1264 = vpop.f32.mrf.mxu0
    %1265 = vdwg.mxu0
    %1266 = vmatpush.bf16.msra.mxu0 %v1025
    %1267 = vmatpush.bf16.msra.mxu0 %v1021
    %1268 = vmatpush.bf16.msra.mxu0 %v1017
    %1269 = vmatpush.bf16.msra.mxu0 %v1013
    %1270 = vmatpush.bf16.msra.mxu0 %v1009
    %1271 = vmatpush.bf16.msra.mxu0 %v1005
    %1272 = vmatpush.bf16.msra.mxu0 %v1001
    %1273 = vmatpush.bf16.msra.mxu0 %v997
    %1274 = vmatmul.bf16.gmra.mxu0 %v408
    %v1275 = vpop.f32.mrf.mxu0
    %v1276 = vadd.f32 %v1263, %v1275
    %v1277 = vpop.f32.mrf.mxu0
    %1278 = vdwg.mxu0
    %1279 = vmatpush.bf16.msra.mxu0 %v1057
    %1280 = vmatpush.bf16.msra.mxu0 %v1053
    %1281 = vmatpush.bf16.msra.mxu0 %v1049
    %1282 = vmatpush.bf16.msra.mxu0 %v1045
    %1283 = vmatpush.bf16.msra.mxu0 %v1041
    %1284 = vmatpush.bf16.msra.mxu0 %v1037
    %1285 = vmatpush.bf16.msra.mxu0 %v1033
    %1286 = vmatpush.bf16.msra.mxu0 %v1029
    %1287 = vmatmul.bf16.gmra.mxu0 %v409
    %v1288 = vpop.f32.mrf.mxu0
    %v1289 = vadd.f32 %v1276, %v1288
    %v1290 = vpop.f32.mrf.mxu0
    %1291 = vdwg.mxu0
    %1292 = vmatpush.bf16.msra.mxu0 %v962
    %1293 = vmatpush.bf16.msra.mxu0 %v958
    %1294 = vmatpush.bf16.msra.mxu0 %v954
    %1295 = vmatpush.bf16.msra.mxu0 %v950
    %1296 = vmatpush.bf16.msra.mxu0 %v946
    %1297 = vmatpush.bf16.msra.mxu0 %v942
    %1298 = vmatpush.bf16.msra.mxu0 %v938
    %1299 = vmatpush.bf16.msra.mxu0 %v934
    %1300 = vmatmul.bf16.gmra.mxu0 %v406
    %v1301 = vpop.f32.mrf.mxu0
    %v1302 = vadd.f32 %v542, %v1301
    %v1303 = vpop.f32.mrf.mxu0
    %1304 = vdwg.mxu0
    %1305 = vmatpush.bf16.msra.mxu0 %v994
    %1306 = vmatpush.bf16.msra.mxu0 %v990
    %1307 = vmatpush.bf16.msra.mxu0 %v986
    %1308 = vmatpush.bf16.msra.mxu0 %v982
    %1309 = vmatpush.bf16.msra.mxu0 %v978
    %1310 = vmatpush.bf16.msra.mxu0 %v974
    %1311 = vmatpush.bf16.msra.mxu0 %v970
    %1312 = vmatpush.bf16.msra.mxu0 %v966
    %1313 = vmatmul.bf16.gmra.mxu0 %v407
    %v1314 = vpop.f32.mrf.mxu0
    %v1315 = vadd.f32 %v1302, %v1314
    %v1316 = vpop.f32.mrf.mxu0
    %1317 = vdwg.mxu0
    %1318 = vmatpush.bf16.msra.mxu0 %v1026
    %1319 = vmatpush.bf16.msra.mxu0 %v1022
    %1320 = vmatpush.bf16.msra.mxu0 %v1018
    %1321 = vmatpush.bf16.msra.mxu0 %v1014
    %1322 = vmatpush.bf16.msra.mxu0 %v1010
    %1323 = vmatpush.bf16.msra.mxu0 %v1006
    %1324 = vmatpush.bf16.msra.mxu0 %v1002
    %1325 = vmatpush.bf16.msra.mxu0 %v998
    %1326 = vmatmul.bf16.gmra.mxu0 %v408
    %v1327 = vpop.f32.mrf.mxu0
    %v1328 = vadd.f32 %v1315, %v1327
    %v1329 = vpop.f32.mrf.mxu0
    %1330 = vdwg.mxu0
    %1331 = vmatpush.bf16.msra.mxu0 %v1058
    %1332 = vmatpush.bf16.msra.mxu0 %v1054
    %1333 = vmatpush.bf16.msra.mxu0 %v1050
    %1334 = vmatpush.bf16.msra.mxu0 %v1046
    %1335 = vmatpush.bf16.msra.mxu0 %v1042
    %1336 = vmatpush.bf16.msra.mxu0 %v1038
    %1337 = vmatpush.bf16.msra.mxu0 %v1034
    %1338 = vmatpush.bf16.msra.mxu0 %v1030
    %1339 = vmatmul.bf16.gmra.mxu0 %v409
    %v1340 = vpop.f32.mrf.mxu0
    %v1341 = vadd.f32 %v1328, %v1340
    %v1342 = vpop.f32.mrf.mxu0
    %1343 = vdwg.mxu0
    %1344 = vmatpush.bf16.msra.mxu0 %v963
    %1345 = vmatpush.bf16.msra.mxu0 %v959
    %1346 = vmatpush.bf16.msra.mxu0 %v955
    %1347 = vmatpush.bf16.msra.mxu0 %v951
    %1348 = vmatpush.bf16.msra.mxu0 %v947
    %1349 = vmatpush.bf16.msra.mxu0 %v943
    %1350 = vmatpush.bf16.msra.mxu0 %v939
    %1351 = vmatpush.bf16.msra.mxu0 %v935
    %1352 = vmatmul.bf16.gmra.mxu0 %v406
    %v1353 = vpop.f32.mrf.mxu0
    %v1354 = vadd.f32 %v543, %v1353
    %v1355 = vpop.f32.mrf.mxu0
    %1356 = vdwg.mxu0
    %1357 = vmatpush.bf16.msra.mxu0 %v995
    %1358 = vmatpush.bf16.msra.mxu0 %v991
    %1359 = vmatpush.bf16.msra.mxu0 %v987
    %1360 = vmatpush.bf16.msra.mxu0 %v983
    %1361 = vmatpush.bf16.msra.mxu0 %v979
    %1362 = vmatpush.bf16.msra.mxu0 %v975
    %1363 = vmatpush.bf16.msra.mxu0 %v971
    %1364 = vmatpush.bf16.msra.mxu0 %v967
    %1365 = vmatmul.bf16.gmra.mxu0 %v407
    %v1366 = vpop.f32.mrf.mxu0
    %v1367 = vadd.f32 %v1354, %v1366
    %v1368 = vpop.f32.mrf.mxu0
    %1369 = vdwg.mxu0
    %1370 = vmatpush.bf16.msra.mxu0 %v1027
    %1371 = vmatpush.bf16.msra.mxu0 %v1023
    %1372 = vmatpush.bf16.msra.mxu0 %v1019
    %1373 = vmatpush.bf16.msra.mxu0 %v1015
    %1374 = vmatpush.bf16.msra.mxu0 %v1011
    %1375 = vmatpush.bf16.msra.mxu0 %v1007
    %1376 = vmatpush.bf16.msra.mxu0 %v1003
    %1377 = vmatpush.bf16.msra.mxu0 %v999
    %1378 = vmatmul.bf16.gmra.mxu0 %v408
    %v1379 = vpop.f32.mrf.mxu0
    %v1380 = vadd.f32 %v1367, %v1379
    %v1381 = vpop.f32.mrf.mxu0
    %1382 = vdwg.mxu0
    %1383 = vmatpush.bf16.msra.mxu0 %v1059
    %1384 = vmatpush.bf16.msra.mxu0 %v1055
    %1385 = vmatpush.bf16.msra.mxu0 %v1051
    %1386 = vmatpush.bf16.msra.mxu0 %v1047
    %1387 = vmatpush.bf16.msra.mxu0 %v1043
    %1388 = vmatpush.bf16.msra.mxu0 %v1039
    %1389 = vmatpush.bf16.msra.mxu0 %v1035
    %1390 = vmatpush.bf16.msra.mxu0 %v1031
    %1391 = vmatmul.bf16.gmra.mxu0 %v409
    %v1392 = vpop.f32.mrf.mxu0
    %v1393 = vadd.f32 %v1380, %v1392
    %v1394 = vpop.f32.mrf.mxu0
    %1395 = vdwg.mxu0
    %v1396 = vmax.f32 %v1237, 0.0
    %v1397 = vmax.f32 %v1289, 0.0
    %v1398 = vmax.f32 %v1341, 0.0
    %v1399 = vmax.f32 %v1393, 0.0
    %v1400 = vld [vmem:[%s7] sm:$0xf]
    %v1401 = vld [vmem:[#allocation14] sm:$0xf]
    %v1402 = vadd.f32 %v1396, %v1397
    %v1403 = vadd.f32 %v1402, %v1398
    %v1404 = vadd.f32 %v1403, %v1399
    %1405 = vadd.xlane.f32.xlu0 %v1404
    %v1406 = vpop.xlane.xlu0 %1405
    %v1407 = vmul.f32 %v1406, 0.0025
    %v1408 = vmul.f32 %v1396, %v1396
    %v1409 = vmul.f32 %v1397, %v1397
    %v1410 = vmul.f32 %v1398, %v1398
    %v1411 = vmul.f32 %v1399, %v1399
    %v1412 = vadd.f32 %v1408, %v1409
    %v1413 = vadd.f32 %v1412, %v1410
    %v1414 = vadd.f32 %v1413, %v1411
    %1415 = vadd.xlane.f32.xlu0 %v1414
    %v1416 = vpop.xlane.xlu0 %1415
    %v1417 = vmul.f32 %v1416, 0.0025
    %v1418 = vmul.f32 %v1407, %v1407
    %v1419 = vsub.f32 %v1417, %v1418
    %v1420 = vadd.f32 %v1419, 1e-05
    %v1421 = vrsqrt.pop %v1420
    %v1422 = vmul.f32 %v1421, %v1420
    %v1423 = vmul.f32 %v1422, %v1421
    %v1424 = vmul.f32 0.5, %v1423
    %v1425 = vsub.f32 1.5, %v1424
    %v1426 = vmul.f32 %v1421, %v1425
    %vm1427 = vweird.f32 %v1420
    %vm1428 = vweird.f32 %v1421
    %vm1429 = vmor %vm1427, %vm1428
    %v1430 = vsel %vm1429, %v1421, %v1426
    %v1431 = vsub.f32 %v1396, %v1407
    %v1432 = vsub.f32 %v1397, %v1407
    %v1433 = vsub.f32 %v1398, %v1407
    %v1434 = vsub.f32 %v1399, %v1407
    %v1435 = vmul.f32 %v1431, %v1430
    %v1436 = vmul.f32 %v1432, %v1430
    %v1437 = vmul.f32 %v1433, %v1430
    %v1438 = vmul.f32 %v1434, %v1430
    %v1440 = vperm.slane %v1400, 0
    %v1441 = vperm.slane %v1400, 1
    %v1442 = vperm.slane %v1400, 2
    %v1443 = vperm.slane %v1400, 3
    %v1448 = vmul.f32 %v1435, %v1440
    %v1449 = vmul.f32 %v1436, %v1441
    %v1450 = vmul.f32 %v1437, %v1442
    %v1451 = vmul.f32 %v1438, %v1443
    %v1453 = vperm.slane %v1401, 0
    %v1454 = vperm.slane %v1401, 1
    %v1455 = vperm.slane %v1401, 2
    %v1456 = vperm.slane %v1401, 3
    %v1461 = vadd.f32 %v1448, %v1453
    %v1462 = vadd.f32 %v1449, %v1454
    %v1463 = vadd.f32 %v1450, %v1455
    %v1464 = vadd.f32 %v1451, %v1456
    %v1465 = vpack.c.bf16 %v1461, %v1461
    %v1466 = vpack.c.bf16 %v1462, %v1462
    %v1467 = vpack.c.bf16 %v1463, %v1463
    %v1468 = vpack.c.bf16 %v1464, %v1464
    %v1469 = vld [vmem:[#allocation15] sm:$0xff]
    %v1470 = vld [vmem:[#allocation15 + $0x8] sm:$0xf]
    %v1471 = vld [vmem:[#allocation15 + $0xc] sm:$0xff]
    %v1472 = vld [vmem:[#allocation15 + $0x14] sm:$0xf]
    %v1473 = vld [vmem:[#allocation15 + $0x18] sm:$0xff]
    %v1474 = vld [vmem:[#allocation15 + $0x20] sm:$0xf]
    %v1475 = vld [vmem:[#allocation15 + $0x24] sm:$0xff]
    %v1476 = vld [vmem:[#allocation15 + $0x2c] sm:$0xf]
    %v1477 = vld [vmem:[#allocation15 + $0x30] sm:$0xff]
    %v1478 = vld [vmem:[#allocation15 + $0x38] sm:$0xf]
    %v1479 = vld [vmem:[#allocation15 + $0x3c] sm:$0xff]
    %v1480 = vld [vmem:[#allocation15 + $0x44] sm:$0xf]
    %v1481 = vld [vmem:[#allocation15 + $0x48] sm:$0xff]
    %v1482 = vld [vmem:[#allocation15 + $0x50] sm:$0xf]
    %v1483 = vld [vmem:[#allocation15 + $0x54] sm:$0xff]
    %v1484 = vld [vmem:[#allocation15 + $0x5c] sm:$0xf]
    %v1485 = vld [vmem:[#allocation15 + $0x60] sm:$0xff]
    %v1486 = vld [vmem:[#allocation15 + $0x68] sm:$0xf]
    %v1487 = vld [vmem:[#allocation15 + $0x6c] sm:$0xff]
    %v1488 = vld [vmem:[#allocation15 + $0x74] sm:$0xf]
    %v1489 = vld [vmem:[#allocation15 + $0x78] sm:$0xff]
    %v1490 = vld [vmem:[#allocation15 + $0x80] sm:$0xf]
    %v1491 = vld [vmem:[#allocation15 + $0x84] sm:$0xff]
    %v1492 = vld [vmem:[#allocation15 + $0x8c] sm:$0xf]
    %v1493 = vld [vmem:[#allocation15 + $0x90] sm:$0xff]
    %v1494 = vld [vmem:[#allocation15 + $0x98] sm:$0xf]
    %v1495 = vld [vmem:[#allocation15 + $0x9c] sm:$0xff]
    %v1496 = vld [vmem:[#allocation15 + $0xa4] sm:$0xf]
    %v1497 = vld [vmem:[#allocation15 + $0xa8] sm:$0xff]
    %v1498 = vld [vmem:[#allocation15 + $0xb0] sm:$0xf]
    %v1499 = vld [vmem:[#allocation15 + $0xb4] sm:$0xff]
    %v1500 = vld [vmem:[#allocation15 + $0xbc] sm:$0xf]
    %v1501 = vld [vmem:[#allocation15 + $0xc0] sm:$0xff]
    %v1502 = vld [vmem:[#allocation15 + $0xc8] sm:$0xf]
    %v1503 = vld [vmem:[#allocation15 + $0xcc] sm:$0xff]
    %v1504 = vld [vmem:[#allocation15 + $0xd4] sm:$0xf]
    %v1505 = vld [vmem:[#allocation15 + $0xd8] sm:$0xff]
    %v1506 = vld [vmem:[#allocation15 + $0xe0] sm:$0xf]
    %v1507 = vld [vmem:[#allocation15 + $0xe4] sm:$0xff]
    %v1508 = vld [vmem:[#allocation15 + $0xec] sm:$0xf]
    %v1509 = vld [vmem:[#allocation15 + $0xf0] sm:$0xff]
    %v1510 = vld [vmem:[#allocation15 + $0xf8] sm:$0xf]
    %v1511 = vld [vmem:[#allocation15 + $0xfc] sm:$0xff]
    %v1512 = vld [vmem:[#allocation15 + $0x104] sm:$0xf]
    %v1513 = vld [vmem:[#allocation15 + $0x108] sm:$0xff]
    %v1514 = vld [vmem:[#allocation15 + $0x110] sm:$0xf]
    %v1515 = vld [vmem:[#allocation15 + $0x114] sm:$0xff]
    %v1516 = vld [vmem:[#allocation15 + $0x11c] sm:$0xf]
    %v1517 = vld [vmem:[#allocation15 + $0x120] sm:$0xff]
    %v1518 = vld [vmem:[#allocation15 + $0x128] sm:$0xf]
    %v1519 = vld [vmem:[#allocation15 + $0x12c] sm:$0xff]
    %v1520 = vld [vmem:[#allocation15 + $0x134] sm:$0xf]
    %v1521 = vld [vmem:[#allocation15 + $0x138] sm:$0xff]
    %v1522 = vld [vmem:[#allocation15 + $0x140] sm:$0xf]
    %v1523 = vld [vmem:[#allocation15 + $0x144] sm:$0xff]
    %v1524 = vld [vmem:[#allocation15 + $0x14c] sm:$0xf]
    %v1525 = vld [vmem:[#allocation15 + $0x150] sm:$0xff]
    %v1526 = vld [vmem:[#allocation15 + $0x158] sm:$0xf]
    %v1527 = vld [vmem:[#allocation15 + $0x15c] sm:$0xff]
    %v1528 = vld [vmem:[#allocation15 + $0x164] sm:$0xf]
    %v1529 = vld [vmem:[#allocation15 + $0x168] sm:$0xff]
    %v1530 = vld [vmem:[#allocation15 + $0x170] sm:$0xf]
    %v1531 = vld [vmem:[#allocation15 + $0x174] sm:$0xff]
    %v1532 = vld [vmem:[#allocation15 + $0x17c] sm:$0xf]
    %v1533 = vld [vmem:[#allocation15 + $0x180] sm:$0xff]
    %v1534 = vld [vmem:[#allocation15 + $0x188] sm:$0xf]
    %v1535 = vld [vmem:[#allocation15 + $0x18c] sm:$0xff]
    %v1536 = vld [vmem:[#allocation15 + $0x194] sm:$0xf]
    %v1537 = vld [vmem:[#allocation15 + $0x198] sm:$0xff]
    %v1538 = vld [vmem:[#allocation15 + $0x1a0] sm:$0xf]
    %v1539 = vld [vmem:[#allocation15 + $0x1a4] sm:$0xff]
    %v1540 = vld [vmem:[#allocation15 + $0x1ac] sm:$0xf]
    %v1541 = vld [vmem:[#allocation15 + $0x1b0] sm:$0xff]
    %v1542 = vld [vmem:[#allocation15 + $0x1b8] sm:$0xf]
    %v1543 = vld [vmem:[#allocation15 + $0x1bc] sm:$0xff]
    %v1544 = vld [vmem:[#allocation15 + $0x1c4] sm:$0xf]
    %v1545 = vld [vmem:[#allocation15 + $0x1c8] sm:$0xff]
    %v1546 = vld [vmem:[#allocation15 + $0x1d0] sm:$0xf]
    %v1547 = vld [vmem:[#allocation15 + $0x1d4] sm:$0xff]
    %v1548 = vld [vmem:[#allocation15 + $0x1dc] sm:$0xf]
    %v1549 = vld [vmem:[#allocation15 + $0x1e0] sm:$0xff]
    %v1550 = vld [vmem:[#allocation15 + $0x1e8] sm:$0xf]
    %v1551 = vld [vmem:[#allocation15 + $0x1ec] sm:$0xff]
    %v1552 = vld [vmem:[#allocation15 + $0x1f4] sm:$0xf]
    %v1553 = vld [vmem:[#allocation15 + $0x1f8] sm:$0xff]
    %v1554 = vld [vmem:[#allocation15 + $0x200] sm:$0xf]
    %v1555 = vld [vmem:[#allocation15 + $0x204] sm:$0xff]
    %v1556 = vld [vmem:[#allocation15 + $0x20c] sm:$0xf]
    %v1557 = vld [vmem:[#allocation15 + $0x210] sm:$0xff]
    %v1558 = vld [vmem:[#allocation15 + $0x218] sm:$0xf]
    %v1559 = vld [vmem:[#allocation15 + $0x21c] sm:$0xff]
    %v1560 = vld [vmem:[#allocation15 + $0x224] sm:$0xf]
    %v1561 = vld [vmem:[#allocation15 + $0x228] sm:$0xff]
    %v1562 = vld [vmem:[#allocation15 + $0x230] sm:$0xf]
    %v1563 = vld [vmem:[#allocation15 + $0x234] sm:$0xff]
    %v1564 = vld [vmem:[#allocation15 + $0x23c] sm:$0xf]
    %v1565 = vld [vmem:[#allocation15 + $0x240] sm:$0xff]
    %v1566 = vld [vmem:[#allocation15 + $0x248] sm:$0xf]
    %v1567 = vld [vmem:[#allocation15 + $0x24c] sm:$0xff]
    %v1568 = vld [vmem:[#allocation15 + $0x254] sm:$0xf]
    %v1569 = vld [vmem:[#allocation15 + $0x258] sm:$0xff]
    %v1570 = vld [vmem:[#allocation15 + $0x260] sm:$0xf]
    %v1571 = vld [vmem:[#allocation15 + $0x264] sm:$0xff]
    %v1572 = vld [vmem:[#allocation15 + $0x26c] sm:$0xf]
    %v1573 = vld [vmem:[#allocation15 + $0x270] sm:$0xff]
    %v1574 = vld [vmem:[#allocation15 + $0x278] sm:$0xf]
    %v1575 = vld [vmem:[#allocation15 + $0x27c] sm:$0xff]
    %v1576 = vld [vmem:[#allocation15 + $0x284] sm:$0xf]
    %v1577 = vld [vmem:[#allocation15 + $0x288] sm:$0xff]
    %v1578 = vld [vmem:[#allocation15 + $0x290] sm:$0xf]
    %v1579 = vld [vmem:[#allocation15 + $0x294] sm:$0xff]
    %v1580 = vld [vmem:[#allocation15 + $0x29c] sm:$0xf]
    %v1581 = vld [vmem:[#allocation15 + $0x2a0] sm:$0xff]
    %v1582 = vld [vmem:[#allocation15 + $0x2a8] sm:$0xf]
    %v1583 = vld [vmem:[#allocation15 + $0x2ac] sm:$0xff]
    %v1584 = vld [vmem:[#allocation15 + $0x2b4] sm:$0xf]
    %v1585 = vld [vmem:[#allocation15 + $0x2b8] sm:$0xff]
    %v1586 = vld [vmem:[#allocation15 + $0x2c0] sm:$0xf]
    %v1587 = vld [vmem:[#allocation15 + $0x2c4] sm:$0xff]
    %v1588 = vld [vmem:[#allocation15 + $0x2cc] sm:$0xf]
    %v1589 = vld [vmem:[#allocation15 + $0x2d0] sm:$0xff]
    %v1590 = vld [vmem:[#allocation15 + $0x2d8] sm:$0xf]
    %v1591 = vld [vmem:[#allocation15 + $0x2dc] sm:$0xff]
    %v1592 = vld [vmem:[#allocation15 + $0x2e4] sm:$0xf]
    %v1593 = vld [vmem:[#allocation15 + $0x2e8] sm:$0xff]
    %v1594 = vld [vmem:[#allocation15 + $0x2f0] sm:$0xf]
    %v1595 = vld [vmem:[#allocation15 + $0x2f4] sm:$0xff]
    %v1596 = vld [vmem:[#allocation15 + $0x2fc] sm:$0xf]
    %v1597 = vld [vmem:[%s10] sm:$0x7]
    %v1599 = vperm.slane %v1597, 0
    %v1600 = vperm.slane %v1597, 1
    %v1601 = vperm.slane %v1597, 2
    %v1733 = vunpack.c.l.b16 %v1469
    %v1734 = vunpack.c.h.b16 %v1469
    %v1735 = vunpack.c.l.b16 %v1470
    %v1736 = vunpack.c.l.b16 %v1471
    %v1737 = vunpack.c.h.b16 %v1471
    %v1738 = vunpack.c.l.b16 %v1472
    %v1739 = vunpack.c.l.b16 %v1473
    %v1740 = vunpack.c.h.b16 %v1473
    %v1741 = vunpack.c.l.b16 %v1474
    %v1742 = vunpack.c.l.b16 %v1475
    %v1743 = vunpack.c.h.b16 %v1475
    %v1744 = vunpack.c.l.b16 %v1476
    %v1745 = vunpack.c.l.b16 %v1477
    %v1746 = vunpack.c.h.b16 %v1477
    %v1747 = vunpack.c.l.b16 %v1478
    %v1748 = vunpack.c.l.b16 %v1479
    %v1749 = vunpack.c.h.b16 %v1479
    %v1750 = vunpack.c.l.b16 %v1480
    %v1751 = vunpack.c.l.b16 %v1481
    %v1752 = vunpack.c.h.b16 %v1481
    %v1753 = vunpack.c.l.b16 %v1482
    %v1754 = vunpack.c.l.b16 %v1483
    %v1755 = vunpack.c.h.b16 %v1483
    %v1756 = vunpack.c.l.b16 %v1484
    %v1757 = vunpack.c.l.b16 %v1485
    %v1758 = vunpack.c.h.b16 %v1485
    %v1759 = vunpack.c.l.b16 %v1486
    %v1760 = vunpack.c.l.b16 %v1487
    %v1761 = vunpack.c.h.b16 %v1487
    %v1762 = vunpack.c.l.b16 %v1488
    %v1763 = vunpack.c.l.b16 %v1489
    %v1764 = vunpack.c.h.b16 %v1489
    %v1765 = vunpack.c.l.b16 %v1490
    %v1766 = vunpack.c.l.b16 %v1491
    %v1767 = vunpack.c.h.b16 %v1491
    %v1768 = vunpack.c.l.b16 %v1492
    %v1769 = vunpack.c.l.b16 %v1493
    %v1770 = vunpack.c.h.b16 %v1493
    %v1771 = vunpack.c.l.b16 %v1494
    %v1772 = vunpack.c.l.b16 %v1495
    %v1773 = vunpack.c.h.b16 %v1495
    %v1774 = vunpack.c.l.b16 %v1496
    %v1775 = vunpack.c.l.b16 %v1497
    %v1776 = vunpack.c.h.b16 %v1497
    %v1777 = vunpack.c.l.b16 %v1498
    %v1778 = vunpack.c.l.b16 %v1499
    %v1779 = vunpack.c.h.b16 %v1499
    %v1780 = vunpack.c.l.b16 %v1500
    %v1781 = vunpack.c.l.b16 %v1501
    %v1782 = vunpack.c.h.b16 %v1501
    %v1783 = vunpack.c.l.b16 %v1502
    %v1784 = vunpack.c.l.b16 %v1503
    %v1785 = vunpack.c.h.b16 %v1503
    %v1786 = vunpack.c.l.b16 %v1504
    %v1787 = vunpack.c.l.b16 %v1505
    %v1788 = vunpack.c.h.b16 %v1505
    %v1789 = vunpack.c.l.b16 %v1506
    %v1790 = vunpack.c.l.b16 %v1507
    %v1791 = vunpack.c.h.b16 %v1507
    %v1792 = vunpack.c.l.b16 %v1508
    %v1793 = vunpack.c.l.b16 %v1509
    %v1794 = vunpack.c.h.b16 %v1509
    %v1795 = vunpack.c.l.b16 %v1510
    %v1796 = vunpack.c.l.b16 %v1511
    %v1797 = vunpack.c.h.b16 %v1511
    %v1798 = vunpack.c.l.b16 %v1512
    %v1799 = vunpack.c.l.b16 %v1513
    %v1800 = vunpack.c.h.b16 %v1513
    %v1801 = vunpack.c.l.b16 %v1514
    %v1802 = vunpack.c.l.b16 %v1515
    %v1803 = vunpack.c.h.b16 %v1515
    %v1804 = vunpack.c.l.b16 %v1516
    %v1805 = vunpack.c.l.b16 %v1517
    %v1806 = vunpack.c.h.b16 %v1517
    %v1807 = vunpack.c.l.b16 %v1518
    %v1808 = vunpack.c.l.b16 %v1519
    %v1809 = vunpack.c.h.b16 %v1519
    %v1810 = vunpack.c.l.b16 %v1520
    %v1811 = vunpack.c.l.b16 %v1521
    %v1812 = vunpack.c.h.b16 %v1521
    %v1813 = vunpack.c.l.b16 %v1522
    %v1814 = vunpack.c.l.b16 %v1523
    %v1815 = vunpack.c.h.b16 %v1523
    %v1816 = vunpack.c.l.b16 %v1524
    %v1817 = vunpack.c.l.b16 %v1525
    %v1818 = vunpack.c.h.b16 %v1525
    %v1819 = vunpack.c.l.b16 %v1526
    %v1820 = vunpack.c.l.b16 %v1527
    %v1821 = vunpack.c.h.b16 %v1527
    %v1822 = vunpack.c.l.b16 %v1528
    %v1823 = vunpack.c.l.b16 %v1529
    %v1824 = vunpack.c.h.b16 %v1529
    %v1825 = vunpack.c.l.b16 %v1530
    %v1826 = vunpack.c.l.b16 %v1531
    %v1827 = vunpack.c.h.b16 %v1531
    %v1828 = vunpack.c.l.b16 %v1532
    %v1829 = vunpack.c.l.b16 %v1533
    %v1830 = vunpack.c.h.b16 %v1533
    %v1831 = vunpack.c.l.b16 %v1534
    %v1832 = vunpack.c.l.b16 %v1535
    %v1833 = vunpack.c.h.b16 %v1535
    %v1834 = vunpack.c.l.b16 %v1536
    %v1835 = vunpack.c.l.b16 %v1537
    %v1836 = vunpack.c.h.b16 %v1537
    %v1837 = vunpack.c.l.b16 %v1538
    %v1838 = vunpack.c.l.b16 %v1539
    %v1839 = vunpack.c.h.b16 %v1539
    %v1840 = vunpack.c.l.b16 %v1540
    %v1841 = vunpack.c.l.b16 %v1541
    %v1842 = vunpack.c.h.b16 %v1541
    %v1843 = vunpack.c.l.b16 %v1542
    %v1844 = vunpack.c.l.b16 %v1543
    %v1845 = vunpack.c.h.b16 %v1543
    %v1846 = vunpack.c.l.b16 %v1544
    %v1847 = vunpack.c.l.b16 %v1545
    %v1848 = vunpack.c.h.b16 %v1545
    %v1849 = vunpack.c.l.b16 %v1546
    %v1850 = vunpack.c.l.b16 %v1547
    %v1851 = vunpack.c.h.b16 %v1547
    %v1852 = vunpack.c.l.b16 %v1548
    %v1853 = vunpack.c.l.b16 %v1549
    %v1854 = vunpack.c.h.b16 %v1549
    %v1855 = vunpack.c.l.b16 %v1550
    %v1856 = vunpack.c.l.b16 %v1551
    %v1857 = vunpack.c.h.b16 %v1551
    %v1858 = vunpack.c.l.b16 %v1552
    %v1859 = vunpack.c.l.b16 %v1553
    %v1860 = vunpack.c.h.b16 %v1553
    %v1861 = vunpack.c.l.b16 %v1554
    %v1862 = vunpack.c.l.b16 %v1555
    %v1863 = vunpack.c.h.b16 %v1555
    %v1864 = vunpack.c.l.b16 %v1556
    %v1865 = vunpack.c.l.b16 %v1557
    %v1866 = vunpack.c.h.b16 %v1557
    %v1867 = vunpack.c.l.b16 %v1558
    %v1868 = vunpack.c.l.b16 %v1559
    %v1869 = vunpack.c.h.b16 %v1559
    %v1870 = vunpack.c.l.b16 %v1560
    %v1871 = vunpack.c.l.b16 %v1561
    %v1872 = vunpack.c.h.b16 %v1561
    %v1873 = vunpack.c.l.b16 %v1562
    %v1874 = vunpack.c.l.b16 %v1563
    %v1875 = vunpack.c.h.b16 %v1563
    %v1876 = vunpack.c.l.b16 %v1564
    %v1877 = vunpack.c.l.b16 %v1565
    %v1878 = vunpack.c.h.b16 %v1565
    %v1879 = vunpack.c.l.b16 %v1566
    %v1880 = vunpack.c.l.b16 %v1567
    %v1881 = vunpack.c.h.b16 %v1567
    %v1882 = vunpack.c.l.b16 %v1568
    %v1883 = vunpack.c.l.b16 %v1569
    %v1884 = vunpack.c.h.b16 %v1569
    %v1885 = vunpack.c.l.b16 %v1570
    %v1886 = vunpack.c.l.b16 %v1571
    %v1887 = vunpack.c.h.b16 %v1571
    %v1888 = vunpack.c.l.b16 %v1572
    %v1889 = vunpack.c.l.b16 %v1573
    %v1890 = vunpack.c.h.b16 %v1573
    %v1891 = vunpack.c.l.b16 %v1574
    %v1892 = vunpack.c.l.b16 %v1575
    %v1893 = vunpack.c.h.b16 %v1575
    %v1894 = vunpack.c.l.b16 %v1576
    %v1895 = vunpack.c.l.b16 %v1577
    %v1896 = vunpack.c.h.b16 %v1577
    %v1897 = vunpack.c.l.b16 %v1578
    %v1898 = vunpack.c.l.b16 %v1579
    %v1899 = vunpack.c.h.b16 %v1579
    %v1900 = vunpack.c.l.b16 %v1580
    %v1901 = vunpack.c.l.b16 %v1581
    %v1902 = vunpack.c.h.b16 %v1581
    %v1903 = vunpack.c.l.b16 %v1582
    %v1904 = vunpack.c.l.b16 %v1583
    %v1905 = vunpack.c.h.b16 %v1583
    %v1906 = vunpack.c.l.b16 %v1584
    %v1907 = vunpack.c.l.b16 %v1585
    %v1908 = vunpack.c.h.b16 %v1585
    %v1909 = vunpack.c.l.b16 %v1586
    %v1910 = vunpack.c.l.b16 %v1587
    %v1911 = vunpack.c.h.b16 %v1587
    %v1912 = vunpack.c.l.b16 %v1588
    %v1913 = vunpack.c.l.b16 %v1589
    %v1914 = vunpack.c.h.b16 %v1589
    %v1915 = vunpack.c.l.b16 %v1590
    %v1916 = vunpack.c.l.b16 %v1591
    %v1917 = vunpack.c.h.b16 %v1591
    %v1918 = vunpack.c.l.b16 %v1592
    %v1919 = vunpack.c.l.b16 %v1593
    %v1920 = vunpack.c.h.b16 %v1593
    %v1921 = vunpack.c.l.b16 %v1594
    %v1922 = vunpack.c.l.b16 %v1595
    %v1923 = vunpack.c.h.b16 %v1595
    %v1924 = vunpack.c.l.b16 %v1596
    %v1925 = vpack.c.b16 %v1736, %v1733
    %v1926 = vpack.c.b16 %v1737, %v1734
    %v1927 = vpack.c.b16 %v1738, %v1735
    %v1928 = vpack.c.b16 %v1742, %v1739
    %v1929 = vpack.c.b16 %v1743, %v1740
    %v1930 = vpack.c.b16 %v1744, %v1741
    %v1931 = vpack.c.b16 %v1748, %v1745
    %v1932 = vpack.c.b16 %v1749, %v1746
    %v1933 = vpack.c.b16 %v1750, %v1747
    %v1934 = vpack.c.b16 %v1754, %v1751
    %v1935 = vpack.c.b16 %v1755, %v1752
    %v1936 = vpack.c.b16 %v1756, %v1753
    %v1937 = vpack.c.b16 %v1760, %v1757
    %v1938 = vpack.c.b16 %v1761, %v1758
    %v1939 = vpack.c.b16 %v1762, %v1759
    %v1940 = vpack.c.b16 %v1766, %v1763
    %v1941 = vpack.c.b16 %v1767, %v1764
    %v1942 = vpack.c.b16 %v1768, %v1765
    %v1943 = vpack.c.b16 %v1772, %v1769
    %v1944 = vpack.c.b16 %v1773, %v1770
    %v1945 = vpack.c.b16 %v1774, %v1771
    %v1946 = vpack.c.b16 %v1778, %v1775
    %v1947 = vpack.c.b16 %v1779, %v1776
    %v1948 = vpack.c.b16 %v1780, %v1777
    %v1949 = vpack.c.b16 %v1784, %v1781
    %v1950 = vpack.c.b16 %v1785, %v1782
    %v1951 = vpack.c.b16 %v1786, %v1783
    %v1952 = vpack.c.b16 %v1790, %v1787
    %v1953 = vpack.c.b16 %v1791, %v1788
    %v1954 = vpack.c.b16 %v1792, %v1789
    %v1955 = vpack.c.b16 %v1796, %v1793
    %v1956 = vpack.c.b16 %v1797, %v1794
    %v1957 = vpack.c.b16 %v1798, %v1795
    %v1958 = vpack.c.b16 %v1802, %v1799
    %v1959 = vpack.c.b16 %v1803, %v1800
    %v1960 = vpack.c.b16 %v1804, %v1801
    %v1961 = vpack.c.b16 %v1808, %v1805
    %v1962 = vpack.c.b16 %v1809, %v1806
    %v1963 = vpack.c.b16 %v1810, %v1807
    %v1964 = vpack.c.b16 %v1814, %v1811
    %v1965 = vpack.c.b16 %v1815, %v1812
    %v1966 = vpack.c.b16 %v1816, %v1813
    %v1967 = vpack.c.b16 %v1820, %v1817
    %v1968 = vpack.c.b16 %v1821, %v1818
    %v1969 = vpack.c.b16 %v1822, %v1819
    %v1970 = vpack.c.b16 %v1826, %v1823
    %v1971 = vpack.c.b16 %v1827, %v1824
    %v1972 = vpack.c.b16 %v1828, %v1825
    %v1973 = vpack.c.b16 %v1832, %v1829
    %v1974 = vpack.c.b16 %v1833, %v1830
    %v1975 = vpack.c.b16 %v1834, %v1831
    %v1976 = vpack.c.b16 %v1838, %v1835
    %v1977 = vpack.c.b16 %v1839, %v1836
    %v1978 = vpack.c.b16 %v1840, %v1837
    %v1979 = vpack.c.b16 %v1844, %v1841
    %v1980 = vpack.c.b16 %v1845, %v1842
    %v1981 = vpack.c.b16 %v1846, %v1843
    %v1982 = vpack.c.b16 %v1850, %v1847
    %v1983 = vpack.c.b16 %v1851, %v1848
    %v1984 = vpack.c.b16 %v1852, %v1849
    %v1985 = vpack.c.b16 %v1856, %v1853
    %v1986 = vpack.c.b16 %v1857, %v1854
    %v1987 = vpack.c.b16 %v1858, %v1855
    %v1988 = vpack.c.b16 %v1862, %v1859
    %v1989 = vpack.c.b16 %v1863, %v1860
    %v1990 = vpack.c.b16 %v1864, %v1861
    %v1991 = vpack.c.b16 %v1868, %v1865
    %v1992 = vpack.c.b16 %v1869, %v1866
    %v1993 = vpack.c.b16 %v1870, %v1867
    %v1994 = vpack.c.b16 %v1874, %v1871
    %v1995 = vpack.c.b16 %v1875, %v1872
    %v1996 = vpack.c.b16 %v1876, %v1873
    %v1997 = vpack.c.b16 %v1880, %v1877
    %v1998 = vpack.c.b16 %v1881, %v1878
    %v1999 = vpack.c.b16 %v1882, %v1879
    %v2000 = vpack.c.b16 %v1886, %v1883
    %v2001 = vpack.c.b16 %v1887, %v1884
    %v2002 = vpack.c.b16 %v1888, %v1885
    %v2003 = vpack.c.b16 %v1892, %v1889
    %v2004 = vpack.c.b16 %v1893, %v1890
    %v2005 = vpack.c.b16 %v1894, %v1891
    %v2006 = vpack.c.b16 %v1898, %v1895
    %v2007 = vpack.c.b16 %v1899, %v1896
    %v2008 = vpack.c.b16 %v1900, %v1897
    %v2009 = vpack.c.b16 %v1904, %v1901
    %v2010 = vpack.c.b16 %v1905, %v1902
    %v2011 = vpack.c.b16 %v1906, %v1903
    %v2012 = vpack.c.b16 %v1910, %v1907
    %v2013 = vpack.c.b16 %v1911, %v1908
    %v2014 = vpack.c.b16 %v1912, %v1909
    %v2015 = vpack.c.b16 %v1916, %v1913
    %v2016 = vpack.c.b16 %v1917, %v1914
    %v2017 = vpack.c.b16 %v1918, %v1915
    %v2018 = vpack.c.b16 %v1922, %v1919
    %v2019 = vpack.c.b16 %v1923, %v1920
    %v2020 = vpack.c.b16 %v1924, %v1921
    %2117 = vmatpush.bf16.msra.mxu0 %v1946
    %2118 = vmatpush.bf16.msra.mxu0 %v1943
    %2119 = vmatpush.bf16.msra.mxu0 %v1940
    %2120 = vmatpush.bf16.msra.mxu0 %v1937
    %2121 = vmatpush.bf16.msra.mxu0 %v1934
    %2122 = vmatpush.bf16.msra.mxu0 %v1931
    %2123 = vmatpush.bf16.msra.mxu0 %v1928
    %2124 = vmatpush.bf16.msra.mxu0 %v1925
    %2125 = vmatmul.bf16.gmra.mxu0 %v1465
    %v2126 = vpop.f32.mrf.mxu0
    %v2127 = vadd.f32 %v1599, %v2126
    %v2128 = vpop.f32.mrf.mxu0
    %2129 = vdwg.mxu0
    %2130 = vmatpush.bf16.msra.mxu0 %v1970
    %2131 = vmatpush.bf16.msra.mxu0 %v1967
    %2132 = vmatpush.bf16.msra.mxu0 %v1964
    %2133 = vmatpush.bf16.msra.mxu0 %v1961
    %2134 = vmatpush.bf16.msra.mxu0 %v1958
    %2135 = vmatpush.bf16.msra.mxu0 %v1955
    %2136 = vmatpush.bf16.msra.mxu0 %v1952
    %2137 = vmatpush.bf16.msra.mxu0 %v1949
    %2138 = vmatmul.bf16.gmra.mxu0 %v1466
    %v2139 = vpop.f32.mrf.mxu0
    %v2140 = vadd.f32 %v2127, %v2139
    %v2141 = vpop.f32.mrf.mxu0
    %2142 = vdwg.mxu0
    %2143 = vmatpush.bf16.msra.mxu0 %v1994
    %2144 = vmatpush.bf16.msra.mxu0 %v1991
    %2145 = vmatpush.bf16.msra.mxu0 %v1988
    %2146 = vmatpush.bf16.msra.mxu0 %v1985
    %2147 = vmatpush.bf16.msra.mxu0 %v1982
    %2148 = vmatpush.bf16.msra.mxu0 %v1979
    %2149 = vmatpush.bf16.msra.mxu0 %v1976
    %2150 = vmatpush.bf16.msra.mxu0 %v1973
    %2151 = vmatmul.bf16.gmra.mxu0 %v1467
    %v2152 = vpop.f32.mrf.mxu0
    %v2153 = vadd.f32 %v2140, %v2152
    %v2154 = vpop.f32.mrf.mxu0
    %2155 = vdwg.mxu0
    %2156 = vmatpush.bf16.msra.mxu0 %v2018
    %2157 = vmatpush.bf16.msra.mxu0 %v2015
    %2158 = vmatpush.bf16.msra.mxu0 %v2012
    %2159 = vmatpush.bf16.msra.mxu0 %v2009
    %2160 = vmatpush.bf16.msra.mxu0 %v2006
    %2161 = vmatpush.bf16.msra.mxu0 %v2003
    %2162 = vmatpush.bf16.msra.mxu0 %v2000
    %2163 = vmatpush.bf16.msra.mxu0 %v1997
    %2164 = vmatmul.bf16.gmra.mxu0 %v1468
    %v2165 = vpop.f32.mrf.mxu0
    %v2166 = vadd.f32 %v2153, %v2165
    %v2167 = vpop.f32.mrf.mxu0
    %2168 = vdwg.mxu0
    %2169 = vmatpush.bf16.msra.mxu0 %v1947
    %2170 = vmatpush.bf16.msra.mxu0 %v1944
    %2171 = vmatpush.bf16.msra.mxu0 %v1941
    %2172 = vmatpush.bf16.msra.mxu0 %v1938
    %2173 = vmatpush.bf16.msra.mxu0 %v1935
    %2174 = vmatpush.bf16.msra.mxu0 %v1932
    %2175 = vmatpush.bf16.msra.mxu0 %v1929
    %2176 = vmatpush.bf16.msra.mxu0 %v1926
    %2177 = vmatmul.bf16.gmra.mxu0 %v1465
    %v2178 = vpop.f32.mrf.mxu0
    %v2179 = vadd.f32 %v1600, %v2178
    %v2180 = vpop.f32.mrf.mxu0
    %2181 = vdwg.mxu0
    %2182 = vmatpush.bf16.msra.mxu0 %v1971
    %2183 = vmatpush.bf16.msra.mxu0 %v1968
    %2184 = vmatpush.bf16.msra.mxu0 %v1965
    %2185 = vmatpush.bf16.msra.mxu0 %v1962
    %2186 = vmatpush.bf16.msra.mxu0 %v1959
    %2187 = vmatpush.bf16.msra.mxu0 %v1956
    %2188 = vmatpush.bf16.msra.mxu0 %v1953
    %2189 = vmatpush.bf16.msra.mxu0 %v1950
    %2190 = vmatmul.bf16.gmra.mxu0 %v1466
    %v2191 = vpop.f32.mrf.mxu0
    %v2192 = vadd.f32 %v2179, %v2191
    %v2193 = vpop.f32.mrf.mxu0
    %2194 = vdwg.mxu0
    %2195 = vmatpush.bf16.msra.mxu0 %v1995
    %2196 = vmatpush.bf16.msra.mxu0 %v1992
    %2197 = vmatpush.bf16.msra.mxu0 %v1989
    %2198 = vmatpush.bf16.msra.mxu0 %v1986
    %2199 = vmatpush.bf16.msra.mxu0 %v1983
    %2200 = vmatpush.bf16.msra.mxu0 %v1980
    %2201 = vmatpush.bf16.msra.mxu0 %v1977
    %2202 = vmatpush.bf16.msra.mxu0 %v1974
    %2203 = vmatmul.bf16.gmra.mxu0 %v1467
    %v2204 = vpop.f32.mrf.mxu0
    %v2205 = vadd.f32 %v2192, %v2204
    %v2206 = vpop.f32.mrf.mxu0
    %2207 = vdwg.mxu0
    %2208 = vmatpush.bf16.msra.mxu0 %v2019
    %2209 = vmatpush.bf16.msra.mxu0 %v2016
    %2210 = vmatpush.bf16.msra.mxu0 %v2013
    %2211 = vmatpush.bf16.msra.mxu0 %v2010
    %2212 = vmatpush.bf16.msra.mxu0 %v2007
    %2213 = vmatpush.bf16.msra.mxu0 %v2004
    %2214 = vmatpush.bf16.msra.mxu0 %v2001
    %2215 = vmatpush.bf16.msra.mxu0 %v1998
    %2216 = vmatmul.bf16.gmra.mxu0 %v1468
    %v2217 = vpop.f32.mrf.mxu0
    %v2218 = vadd.f32 %v2205, %v2217
    %v2219 = vpop.f32.mrf.mxu0
    %2220 = vdwg.mxu0
    %2221 = vmatpush.bf16.msra.mxu0 %v1948
    %2222 = vmatpush.bf16.msra.mxu0 %v1945
    %2223 = vmatpush.bf16.msra.mxu0 %v1942
    %2224 = vmatpush.bf16.msra.mxu0 %v1939
    %2225 = vmatpush.bf16.msra.mxu0 %v1936
    %2226 = vmatpush.bf16.msra.mxu0 %v1933
    %2227 = vmatpush.bf16.msra.mxu0 %v1930
    %2228 = vmatpush.bf16.msra.mxu0 %v1927
    %2229 = vmatmul.bf16.gmra.mxu0 %v1465
    %v2230 = vpop.f32.mrf.mxu0
    %v2231 = vadd.f32 %v1601, %v2230
    %v2232 = vpop.f32.mrf.mxu0
    %2233 = vdwg.mxu0
    %2234 = vmatpush.bf16.msra.mxu0 %v1972
    %2235 = vmatpush.bf16.msra.mxu0 %v1969
    %2236 = vmatpush.bf16.msra.mxu0 %v1966
    %2237 = vmatpush.bf16.msra.mxu0 %v1963
    %2238 = vmatpush.bf16.msra.mxu0 %v1960
    %2239 = vmatpush.bf16.msra.mxu0 %v1957
    %2240 = vmatpush.bf16.msra.mxu0 %v1954
    %2241 = vmatpush.bf16.msra.mxu0 %v1951
    %2242 = vmatmul.bf16.gmra.mxu0 %v1466
    %v2243 = vpop.f32.mrf.mxu0
    %v2244 = vadd.f32 %v2231, %v2243
    %v2245 = vpop.f32.mrf.mxu0
    %2246 = vdwg.mxu0
    %2247 = vmatpush.bf16.msra.mxu0 %v1996
    %2248 = vmatpush.bf16.msra.mxu0 %v1993
    %2249 = vmatpush.bf16.msra.mxu0 %v1990
    %2250 = vmatpush.bf16.msra.mxu0 %v1987
    %2251 = vmatpush.bf16.msra.mxu0 %v1984
    %2252 = vmatpush.bf16.msra.mxu0 %v1981
    %2253 = vmatpush.bf16.msra.mxu0 %v1978
    %2254 = vmatpush.bf16.msra.mxu0 %v1975
    %2255 = vmatmul.bf16.gmra.mxu0 %v1467
    %v2256 = vpop.f32.mrf.mxu0
    %v2257 = vadd.f32 %v2244, %v2256
    %v2258 = vpop.f32.mrf.mxu0
    %2259 = vdwg.mxu0
    %2260 = vmatpush.bf16.msra.mxu0 %v2020
    %2261 = vmatpush.bf16.msra.mxu0 %v2017
    %2262 = vmatpush.bf16.msra.mxu0 %v2014
    %2263 = vmatpush.bf16.msra.mxu0 %v2011
    %2264 = vmatpush.bf16.msra.mxu0 %v2008
    %2265 = vmatpush.bf16.msra.mxu0 %v2005
    %2266 = vmatpush.bf16.msra.mxu0 %v2002
    %2267 = vmatpush.bf16.msra.mxu0 %v1999
    %2268 = vmatmul.bf16.gmra.mxu0 %v1468
    %v2269 = vpop.f32.mrf.mxu0
    %v2270 = vadd.f32 %v2257, %v2269
    %v2271 = vpop.f32.mrf.mxu0
    %2272 = vdwg.mxu0
    %v2273 = vmax.f32 %v2166, 0.0
    %v2274 = vmax.f32 %v2218, 0.0
    %v2275 = vmax.f32 %v2270, 0.0
    %v2276 = vld [vmem:[#allocation17] sm:$0x7]
    %v2277 = vld [vmem:[#allocation18] sm:$0x7]
    %v2278 = vadd.f32 %v2273, %v2274
    %v2279 = vadd.f32 %v2278, %v2275
    %2280 = vadd.xlane.f32.xlu0 %v2279
    %v2281 = vpop.xlane.xlu0 %2280
    %v2282 = vmul.f32 %v2281, 0.0033333334
    %v2283 = vmul.f32 %v2273, %v2273
    %v2284 = vmul.f32 %v2274, %v2274
    %v2285 = vmul.f32 %v2275, %v2275
    %v2286 = vadd.f32 %v2283, %v2284
    %v2287 = vadd.f32 %v2286, %v2285
    %2288 = vadd.xlane.f32.xlu0 %v2287
    %v2289 = vpop.xlane.xlu0 %2288
    %v2290 = vmul.f32 %v2289, 0.0033333334
    %v2291 = vmul.f32 %v2282, %v2282
    %v2292 = vsub.f32 %v2290, %v2291
    %v2293 = vadd.f32 %v2292, 1e-05
    %v2294 = vrsqrt.pop %v2293
    %v2295 = vmul.f32 %v2294, %v2293
    %v2296 = vmul.f32 %v2295, %v2294
    %v2297 = vmul.f32 0.5, %v2296
    %v2298 = vsub.f32 1.5, %v2297
    %v2299 = vmul.f32 %v2294, %v2298
    %vm2300 = vweird.f32 %v2293
    %vm2301 = vweird.f32 %v2294
    %vm2302 = vmor %vm2300, %vm2301
    %v2303 = vsel %vm2302, %v2294, %v2299
    %v2304 = vsub.f32 %v2273, %v2282
    %v2305 = vsub.f32 %v2274, %v2282
    %v2306 = vsub.f32 %v2275, %v2282
    %v2307 = vmul.f32 %v2304, %v2303
    %v2308 = vmul.f32 %v2305, %v2303
    %v2309 = vmul.f32 %v2306, %v2303
    %v2311 = vperm.slane %v2276, 0
    %v2312 = vperm.slane %v2276, 1
    %v2313 = vperm.slane %v2276, 2
    %v2317 = vmul.f32 %v2307, %v2311
    %v2318 = vmul.f32 %v2308, %v2312
    %v2319 = vmul.f32 %v2309, %v2313
    %v2321 = vperm.slane %v2277, 0
    %v2322 = vperm.slane %v2277, 1
    %v2323 = vperm.slane %v2277, 2
    %v2327 = vadd.f32 %v2317, %v2321
    %v2328 = vadd.f32 %v2318, %v2322
    %v2329 = vadd.f32 %v2319, %v2323
    %v2330 = vld [vmem:[%s13] sm:$0x7]
    %v2331 = vpack.c.bf16 %v2327, %v2327
    %v2332 = vpack.c.bf16 %v2328, %v2328
    %v2333 = vpack.c.bf16 %v2329, %v2329
    %v2334 = vld [vmem:[#allocation2] sm:$0x1]
    %2336 = vset.pattern.permute.xlu0 0
    %2337 = vperm.xlu0 %2336, %v2334
    %v2338 = vpop.permute.xlu0 %2337
    %v2340 = vperm.slane %v2338, 0
    %2342 = vst [vmem:[#allocation1] ss:$9 sm:$0xff] %v2330
    %v2343 = vld [vmem:[#allocation1] sm:$0xff]
    %v2344 = vld [vmem:[#allocation1 + $0x9] sm:$0xff]
    %v2345 = vld [vmem:[#allocation1 + $0x12] sm:$0xff]
    %2349 = vmatpush.bf16.xpose.msra.mxu0 0
    %2350 = vmatpush.bf16.xpose.msra.mxu0 0
    %2351 = vmatpush.bf16.xpose.msra.mxu0 0
    %2352 = vmatpush.bf16.xpose.msra.mxu0 0
    %2353 = vmatpush.bf16.xpose.msra.mxu0 0
    %2354 = vmatpush.bf16.xpose.msra.mxu0 0
    %2355 = vmatpush.bf16.xpose.msra.mxu0 0
    %2356 = vmatpush.bf16.xpose.msra.mxu0 %v2331
    %2357 = vmatmul.bf16.gmra.mxu0 %v2343
    %v2358 = vpop.f32.mrf.mxu0
    %v2359 = vadd.f32 %v2340, %v2358
    %v2360 = vpop.f32.mrf.mxu0
    %2361 = vdwg.mxu0
    %2362 = vmatpush.bf16.xpose.msra.mxu0 0
    %2363 = vmatpush.bf16.xpose.msra.mxu0 0
    %2364 = vmatpush.bf16.xpose.msra.mxu0 0
    %2365 = vmatpush.bf16.xpose.msra.mxu0 0
    %2366 = vmatpush.bf16.xpose.msra.mxu0 0
    %2367 = vmatpush.bf16.xpose.msra.mxu0 0
    %2368 = vmatpush.bf16.xpose.msra.mxu0 0
    %2369 = vmatpush.bf16.xpose.msra.mxu0 %v2332
    %2370 = vmatmul.bf16.gmra.mxu0 %v2344
    %v2371 = vpop.f32.mrf.mxu0
    %v2372 = vadd.f32 %v2359, %v2371
    %v2373 = vpop.f32.mrf.mxu0
    %2374 = vdwg.mxu0
    %2375 = vmatpush.bf16.xpose.msra.mxu0 0
    %2376 = vmatpush.bf16.xpose.msra.mxu0 0
    %2377 = vmatpush.bf16.xpose.msra.mxu0 0
    %2378 = vmatpush.bf16.xpose.msra.mxu0 0
    %2379 = vmatpush.bf16.xpose.msra.mxu0 0
    %2380 = vmatpush.bf16.xpose.msra.mxu0 0
    %2381 = vmatpush.bf16.xpose.msra.mxu0 0
    %2382 = vmatpush.bf16.xpose.msra.mxu0 %v2333
    %2383 = vmatmul.bf16.gmra.mxu0 %v2345
    %v2384 = vpop.f32.mrf.mxu0
    %v2385 = vadd.f32 %v2372, %v2384
    %v2386 = vpop.f32.mrf.mxu0
    %2387 = vdwg.mxu0
    %vm2388 = vcmask 57344
    %2389 = vst.msk [vmem:[#allocation20] sm:$0x1] %vm2388, %v2385
    // Predicated region
    $region102: #{tpu_custom_call.1} parent=1 // pred_check
      _
    $region103: #{tpu_custom_call.1} parent=1 // pred_check_branch
      %2391 = sbr.rel (0) target = $region105
    $region104: #{tpu_custom_call.1} parent=1 // pred_region
      %2393 = vsyncadd [#allocation5], 0
      %s2395 = sshll.u32 [#allocation20], 4
      %s2396 = int_to_ptr.vmem [resolvable:$true] %s2395
      %s2397 = sshll.u32 %s15, 4
      %s2398 = int_to_ptr.hbm [resolvable:$true] %s2397
      %2400 = dma.vmem_to_hbm [thread:$0]  %s2396, 16, %s2398, [#allocation5]
    $region105: #{tpu_custom_call.1} parent=1 // pred_fallthru
      _
    // Predicated region
    $region106: #{tpu_custom_call.1} parent=1 // pred_check
      _
    $region107: #{tpu_custom_call.1} parent=1 // pred_check_branch
      %2402 = sbr.rel (0) target = $region109
    $region108: #{tpu_custom_call.1} parent=1 // pred_region
      %2404 = dma.done [#allocation5], 16
    $region109: #{tpu_custom_call.1} parent=1 // pred_fallthru
      _
    %2405 = vsyncpa [#allocation4], 1
    %2406 = vsyncpa [#allocation7], 1
    %2407 = vsyncpa [#allocation10], 1
    %2408 = vsyncpa [#allocation13], 1
    %2409 = vsyncpa [#allocation16], 1
    %2410 = vsyncpa [#allocation19], 1
    %2411 = vsyncpa [#allocation5], 1

</llo_original>
